<compile_context>
chip_gen: v5e
topology: v5e:2x2
jax: 0.10.0
libtpu: 0.0.40
codegen_flags: <defaults>
</compile_context>

<pallas_src>
import functools
import math

import jax
import jax.numpy as jnp
from jax.experimental import pallas as pl
from jax.experimental.pallas import tpu as pltpu

TAU = 2.0 * math.pi


def _round_up(x, m):
    return -(-x // m) * m


def _cdiv(a, b):
    return -(-a // b)


# ---------------------------------------------------------------------------
# Pallas kernel: one row-tile of the (N, num_samples_pad) kernel matrix per step.
# ---------------------------------------------------------------------------
def _ck_kernel(psi_ref, z_ref, c_ref, w_exp_ref, vs_ref, vv_ref, o_ref):
    f32 = jnp.float32

    # u rows of this tile: fused frequency contraction (bf16 stream, f32 acc)
    # plus the z @ c term (c precomputed in the wrapper).
    u = (jnp.dot(psi_ref[...], w_exp_ref[...], preferred_element_type=f32)
         + jnp.dot(z_ref[...], c_ref[...], preferred_element_type=f32))  # (T, D)

    # squash_in_sphere(u) = u * sigmoid(||u||) / ||u||, ||u|| = sqrt(sum u^2 + 1e-6)
    # rsqrt / exp / reciprocal all go to the (otherwise idle) EUP slot.
    ss = jnp.sum(u * u, axis=1, keepdims=True) + 1e-6                    # (T, 1)
    inv_nrm = jax.lax.rsqrt(ss)                                          # 1/sqrt(ss)
    nrm = ss * inv_nrm                                                   # sqrt(ss)
    sig = pl.reciprocal(1.0 + jnp.exp(-nrm), approx=True)                # sigmoid
    us = u * (sig * inv_nrm)                                             # (T, D)

    vs = vs_ref[...]                                                     # (M_pad, D), precomputed
    uu = jnp.sum(us * us, axis=1, keepdims=True)                         # (T, 1)

    # uv = us @ vs.T without an in-kernel transpose.
    uv = jax.lax.dot_general(
        us, vs, dimension_numbers=(((1,), (1,)), ((), ())),
        preferred_element_type=f32)                                      # (T, M_pad)

    res = uv - 0.5 * uu - 0.5 * vv_ref[...]                              # vv_ref: (1, M_pad)
    o_ref[...] = (jnp.exp(res) * uv).astype(o_ref.dtype)


# ---------------------------------------------------------------------------
# Wrapper
# ---------------------------------------------------------------------------
@functools.partial(jax.jit, static_argnames=("num_samples", "tile_n"))
def ck_forward(time, z, psi_s, c_s, num_samples, tile_n=512):
    n, d_z = z.shape
    n_psi, d, f = psi_s.shape
    assert n_psi == n and c_s.shape == (d_z, d, f)
    df = d * f
    f32 = jnp.float32

    # --- parameter-sized, grid-invariant glue (plain JAX, computed once) -----
    coeffs = TAU * jnp.arange(f, dtype=f32)
    weights = jnp.cos(jnp.asarray(time, f32) * coeffs)                   # (F,)
    # (D*F, D) block-diagonal expansion: (psi_2d @ w_exp)[i,k] = sum_f psi_s[i,k,f] w_f
    w_exp_f32 = (jnp.eye(d, dtype=f32)[:, None, :]
                 * weights[None, :, None]).reshape(df, d)                # (D*F, D)
    c = jnp.matmul(c_s.reshape(d_z, df).astype(f32), w_exp_f32)          # (d_z, D)

    m = num_samples
    m_pad = max(128, _round_up(m, 128))                                  # lane-dense output cols

    # v-side (first num_samples rows): hoisted out of the kernel grid entirely.
    psi_v = jnp.matmul(psi_s[:m].reshape(m, df).astype(f32), w_exp_f32)  # (m, D)
    u_v = psi_v + jnp.matmul(z[:m].astype(f32), c)                       # (m, D)
    nrm_v = jnp.sqrt(jnp.sum(u_v * u_v, axis=1, keepdims=True) + 1e-6)
    vs = u_v * (jax.nn.sigmoid(nrm_v) / nrm_v)                           # (m, D)
    vs = jnp.pad(vs, ((0, m_pad - m), (0, 0)))                           # padded cols -> exact 0, sliced off
    vv_row = jnp.sum(vs * vs, axis=1)[None, :]                           # (1, m_pad)

    # --- dominant HBM stream: psi_s rows in bf16 (f32 accumulation on MXU) ---
    psi_2d = psi_s.reshape(n, df).astype(jnp.bfloat16)                   # contiguous view + cast
    w_exp = w_exp_f32.astype(jnp.bfloat16)
    z = z.astype(f32)

    # Row tile: big tiles amortize the ~0.35us/step overhead; keep >= 2 grid
    # steps when possible so v7x megacore shards the "parallel" axis.
    tile_n = max(8, min(tile_n, _round_up(n, 8)))
    if n >= 16 and _cdiv(n, tile_n) < 2:
        tile_n = _round_up(_cdiv(n, 2), 8)
    num_tiles = _cdiv(n, tile_n)

    # No row padding: Pallas tolerates the ragged last row tile (OOB input rows
    # read unspecified values, OOB output rows are discarded; math is row-local).
    # Constant-index operands (c, w_exp, vs, vv_row) are tiny here; pl.Buffered(1)
    # would halve their double-buffer footprint if they ever grow (v7x VMEM=64MiB).
    out = pl.pallas_call(
        _ck_kernel,
        out_shape=jax.ShapeDtypeStruct((n, m_pad), f32),
        grid=(num_tiles,),
        in_specs=[
            pl.BlockSpec((tile_n, df), lambda i: (i, 0)),     # psi_s rows (bf16 stream)
            pl.BlockSpec((tile_n, d_z), lambda i: (i, 0)),    # z rows
            pl.BlockSpec((d_z, d), lambda i: (0, 0)),         # c (resident)
            pl.BlockSpec((df, d), lambda i: (0, 0)),          # weight expansion (resident)
            pl.BlockSpec((m_pad, d), lambda i: (0, 0)),       # vs (resident)
            pl.BlockSpec((1, m_pad), lambda i: (0, 0)),       # ||vs||^2 row (resident)
        ],
        out_specs=pl.BlockSpec((tile_n, m_pad), lambda i: (i, 0)),
        compiler_params=pltpu.CompilerParams(
            dimension_semantics=("parallel",)),               # megacore sharding
    )(psi_2d, z, c, w_exp, vs, vv_row)

    if m_pad == m:
        return out
    return out[:, :m]                                         # column-only slice


# ---------------------------------------------------------------------------
# Pure-JAX reference for validation
# ---------------------------------------------------------------------------
def _reference(time, z, psi_s, c_s, num_samples):
    hp = jax.lax.Precision.HIGHEST
    f = psi_s.shape[-1]
    coeffs = TAU * jnp.arange(f, dtype=jnp.float32)
    w = jnp.cos(jnp.asarray(time, jnp.float32) * coeffs)
    c = jnp.einsum("zdf,f->zd", c_s.astype(jnp.float32), w, precision=hp)
    psi = jnp.einsum("ndf,f->nd", psi_s.astype(jnp.float32), w, precision=hp)
    u = psi + jnp.matmul(z.astype(jnp.float32), c, precision=hp)
    v = u[:num_samples]

    def squash(x):
        nrm = jnp.sqrt(jnp.sum(x * x, axis=1, keepdims=True) + 1e-6)
        return x * (jax.nn.sigmoid(nrm) / nrm)

    us, vs = squash(u), squash(v)
    uu = jnp.sum(us * us, axis=1, keepdims=True)
    vv = jnp.sum(vs * vs, axis=1, keepdims=True)
    uv = jnp.matmul(us, vs.T, precision=hp)
    res = uv - uu / 2.0 - vv.T / 2.0
    return jnp.exp(res) * uv


if __name__ == "__main__":
    key = jax.random.PRNGKey(0)
    k_psi, k_c, k_z = jax.random.split(key, 3)

    # Small shapes: N points, z-dim 16, feature dim 32, max_freq 8, 64 samples.
    N, D_Z, D, MAX_FREQ, NUM_SAMPLES = 200, 16, 32, 8, 64
    psi_s = 0.1 * jax.random.normal(k_psi, (N, D, MAX_FREQ), jnp.float32)
    c_s = 0.1 * jax.random.normal(k_c, (D_Z, D, MAX_FREQ), jnp.float32)
    z = jax.random.normal(k_z, (N, D_Z), jnp.float32)
    t = jnp.float32(0.37)

    out = ck_forward(t, z, psi_s, c_s, num_samples=NUM_SAMPLES)
    out = jax.block_until_ready(out)

    ref = _reference(t, z, psi_s, c_s, NUM_SAMPLES)
    assert out.shape == (N, NUM_SAMPLES), (out.shape, (N, NUM_SAMPLES))
    # Tolerance reflects the intentional bf16 streaming of psi_s (f32 accumulation)
    # and the approx-EUP reciprocal in the sigmoid; reference is Precision.HIGHEST f32.
    assert jnp.allclose(out, ref, atol=3e-3, rtol=3e-3), \
        float(jnp.max(jnp.abs(out - ref)))

    print("KERNEL_OK")
</pallas_src>

<mosaic_0001>
module attributes {stable_mosaic.version = 11 : i64} {
  func.func @_ck_kernel(%arg0: i32, %arg1: memref<104x256xbf16, #tpu.memory_space<vmem>>, %arg2: memref<104x16xf32, #tpu.memory_space<vmem>>, %arg3: memref<16x32xf32, #tpu.memory_space<vmem>>, %arg4: memref<256x32xbf16, #tpu.memory_space<vmem>>, %arg5: memref<128x32xf32, #tpu.memory_space<vmem>>, %arg6: memref<1x128xf32, #tpu.memory_space<vmem>>, %arg7: memref<104x128xf32, #tpu.memory_space<vmem>>) attributes {dimension_semantics = [#tpu.dimension_semantics<parallel>], iteration_bounds = array<i64: 2>, scalar_prefetch = 0 : i64, scratch_operands = 0 : i64, tpu.core_type = #tpu.core_type<tc>, window_params = [{transform_indices = @transform_0, window_bounds = array<i64: 104, 256>}, {transform_indices = @transform_1, window_bounds = array<i64: 104, 16>}, {pipeline_mode = #tpu.pipeline_mode<synchronous>, transform_indices = @transform_2, window_bounds = array<i64: 16, 32>}, {pipeline_mode = #tpu.pipeline_mode<synchronous>, transform_indices = @transform_3, window_bounds = array<i64: 256, 32>}, {pipeline_mode = #tpu.pipeline_mode<synchronous>, transform_indices = @transform_4, window_bounds = array<i64: 128, 32>}, {pipeline_mode = #tpu.pipeline_mode<synchronous>, transform_indices = @transform_5, window_bounds = array<i64: 1, 128>}, {transform_indices = @transform_6, window_bounds = array<i64: 104, 128>}]} {
    %c0 = arith.constant 0 : index
    %c0_0 = arith.constant 0 : index
    %0 = vector.load %arg1[%c0, %c0_0] : memref<104x256xbf16, #tpu.memory_space<vmem>>, vector<104x256xbf16>
    %c0_1 = arith.constant 0 : index
    %c0_2 = arith.constant 0 : index
    %1 = vector.load %arg4[%c0_1, %c0_2] : memref<256x32xbf16, #tpu.memory_space<vmem>>, vector<256x32xbf16>
    %cst = arith.constant dense<0.000000e+00> : vector<104x32xf32>
    %2 = tpu.matmul %0, %1, %cst {dimension_numbers = #tpu.dot_dimension_numbers<[1], [0], [0], [1], [0, 0, 1, 1], [], []>} : vector<104x256xbf16>, vector<256x32xbf16>, vector<104x32xf32> -> vector<104x32xf32>
    %c0_3 = arith.constant 0 : index
    %c0_4 = arith.constant 0 : index
    %3 = vector.load %arg2[%c0_3, %c0_4] : memref<104x16xf32, #tpu.memory_space<vmem>>, vector<104x16xf32>
    %c0_5 = arith.constant 0 : index
    %c0_6 = arith.constant 0 : index
    %4 = vector.load %arg3[%c0_5, %c0_6] : memref<16x32xf32, #tpu.memory_space<vmem>>, vector<16x32xf32>
    %cst_7 = arith.constant dense<0.000000e+00> : vector<104x32xf32>
    %5 = tpu.matmul %3, %4, %cst_7 {dimension_numbers = #tpu.dot_dimension_numbers<[1], [0], [0], [1], [0, 0, 1, 1], [], []>} : vector<104x16xf32>, vector<16x32xf32>, vector<104x32xf32> -> vector<104x32xf32>
    %6 = arith.addf %2, %5 : vector<104x32xf32>
    %7 = arith.mulf %6, %6 : vector<104x32xf32>
    %cst_8 = arith.constant dense<0.000000e+00> : vector<104xf32>
    %8 = vector.multi_reduction <add>, %7, %cst_8 [1] : vector<104x32xf32> to vector<104xf32>
    %9 = vector.shape_cast %8 : vector<104xf32> to vector<104x1xf32>
    %cst_9 = arith.constant 9.99999997E-7 : f32
    %10 = vector.broadcast %cst_9 : f32 to vector<104x1xf32>
    %11 = arith.addf %9, %10 : vector<104x1xf32>
    %12 = math.rsqrt %11 : vector<104x1xf32>
    %13 = arith.mulf %11, %12 : vector<104x1xf32>
    %cst_10 = arith.constant 0.000000e+00 : f32
    %14 = vector.broadcast %cst_10 : f32 to vector<104x1xf32>
    %15 = arith.subf %14, %13 : vector<104x1xf32>
    %16 = math.exp %15 : vector<104x1xf32>
    %cst_11 = arith.constant 1.000000e+00 : f32
    %17 = vector.broadcast %cst_11 : f32 to vector<104x1xf32>
    %18 = arith.addf %17, %16 : vector<104x1xf32>
    %19 = tpu.reciprocal %18 {approx = true} : vector<104x1xf32> -> vector<104x1xf32>
    %20 = arith.mulf %19, %12 : vector<104x1xf32>
    %21 = vector.broadcast %20 : vector<104x1xf32> to vector<104x32xf32>
    %22 = arith.mulf %6, %21 : vector<104x32xf32>
    %c0_12 = arith.constant 0 : index
    %c0_13 = arith.constant 0 : index
    %23 = vector.load %arg5[%c0_12, %c0_13] : memref<128x32xf32, #tpu.memory_space<vmem>>, vector<128x32xf32>
    %24 = arith.mulf %22, %22 : vector<104x32xf32>
    %cst_14 = arith.constant dense<0.000000e+00> : vector<104xf32>
    %25 = vector.multi_reduction <add>, %24, %cst_14 [1] : vector<104x32xf32> to vector<104xf32>
    %26 = vector.shape_cast %25 : vector<104xf32> to vector<104x1xf32>
    %cst_15 = arith.constant dense<0.000000e+00> : vector<104x128xf32>
    %27 = tpu.matmul %22, %23, %cst_15 {dimension_numbers = #tpu.dot_dimension_numbers<[1], [1], [0], [0], [0, 0, 1, 0], [], []>} : vector<104x32xf32>, vector<128x32xf32>, vector<104x128xf32> -> vector<104x128xf32>
    %cst_16 = arith.constant 5.000000e-01 : f32
    %28 = vector.broadcast %cst_16 : f32 to vector<104x1xf32>
    %29 = arith.mulf %28, %26 : vector<104x1xf32>
    %30 = vector.broadcast %29 : vector<104x1xf32> to vector<104x128xf32>
    %31 = arith.subf %27, %30 : vector<104x128xf32>
    %c0_17 = arith.constant 0 : index
    %c0_18 = arith.constant 0 : index
    %32 = vector.load %arg6[%c0_17, %c0_18] : memref<1x128xf32, #tpu.memory_space<vmem>>, vector<1x128xf32>
    %cst_19 = arith.constant 5.000000e-01 : f32
    %33 = vector.broadcast %cst_19 : f32 to vector<1x128xf32>
    %34 = arith.mulf %33, %32 : vector<1x128xf32>
    %35 = vector.broadcast %34 : vector<1x128xf32> to vector<104x128xf32>
    %36 = arith.subf %31, %35 : vector<104x128xf32>
    %37 = math.exp %36 : vector<104x128xf32>
    %38 = arith.mulf %37, %27 : vector<104x128xf32>
    %c0_20 = arith.constant 0 : index
    %c0_21 = arith.constant 0 : index
    %39 = vector.load %arg7[%c0_20, %c0_21] : memref<104x128xf32, #tpu.memory_space<vmem>>, vector<104x128xf32>
    tpu.vector_store %arg7[%c0_20, %c0_21], %38 {strides = array<i32>} : memref<104x128xf32, #tpu.memory_space<vmem>>, vector<104x128xf32>,
    return
  }
  func.func @transform_0(%arg0: i32) -> (i32, i32) {
    %c0_i32 = arith.constant 0 : i32
    %c0_i32_0 = arith.constant 0 : i32
    return %arg0, %c0_i32 : i32, i32
  }
  func.func @transform_1(%arg0: i32) -> (i32, i32) {
    %c0_i32 = arith.constant 0 : i32
    %c0_i32_0 = arith.constant 0 : i32
    return %arg0, %c0_i32 : i32, i32
  }
  func.func @transform_2(%arg0: i32) -> (i32, i32) {
    %c0_i32 = arith.constant 0 : i32
    %c0_i32_0 = arith.constant 0 : i32
    %c0_i32_1 = arith.constant 0 : i32
    return %c0_i32, %c0_i32_0 : i32, i32
  }
  func.func @transform_3(%arg0: i32) -> (i32, i32) {
    %c0_i32 = arith.constant 0 : i32
    %c0_i32_0 = arith.constant 0 : i32
    %c0_i32_1 = arith.constant 0 : i32
    return %c0_i32, %c0_i32_0 : i32, i32
  }
  func.func @transform_4(%arg0: i32) -> (i32, i32) {
    %c0_i32 = arith.constant 0 : i32
    %c0_i32_0 = arith.constant 0 : i32
    %c0_i32_1 = arith.constant 0 : i32
    return %c0_i32, %c0_i32_0 : i32, i32
  }
  func.func @transform_5(%arg0: i32) -> (i32, i32) {
    %c0_i32 = arith.constant 0 : i32
    %c0_i32_0 = arith.constant 0 : i32
    %c0_i32_1 = arith.constant 0 : i32
    return %c0_i32, %c0_i32_0 : i32, i32
  }
  func.func @transform_6(%arg0: i32) -> (i32, i32) {
    %c0_i32 = arith.constant 0 : i32
    %c0_i32_0 = arith.constant 0 : i32
    return %arg0, %c0_i32 : i32, i32
  }
}

</mosaic_0001>

<llo_original>
// kernel: ck_forward.1
$region0: #{ck_forward.1}
  #allocation0 [shape = 'u32[]', space=smem, size = 0x4, offset = 0x4, fixed_abs, tag = 'smem constant byte address 0x4 - core index']
  #allocation1 [shape = 'u32[72,128]{1,0:T(1,128)}', space=vmem, size = 0x9000, scoped, tag = 'internal scratch']
  %s0 = inlined_call_operand.vmem [shape: bf16[200,256], index: 0, kind: input, shape index: {}]
  %s1 = inlined_call_operand.vmem [shape: f32[200,16], index: 1, kind: input, shape index: {}]
  %s2 = inlined_call_operand.vmem [shape: f32[16,32], index: 2, kind: input, shape index: {}]
  %s3 = inlined_call_operand.vmem [shape: bf16[256,32], index: 3, kind: input, shape index: {}]
  %s4 = inlined_call_operand.vmem [shape: f32[128,32], index: 4, kind: input, shape index: {}]
  %s5 = inlined_call_operand.vmem [shape: f32[1,128], index: 5, kind: input, shape index: {}]
  %s6 = inlined_call_operand.vmem [shape: f32[200,128], index: 6, kind: output, shape index: {}]
  %s7 = sld [smem:[#allocation0]]
  $region105: #{ck_forward.1} parent=0
    _
  %s9 = ssub.s32 1, %s7
  %s10 = scalar_select 0, %s9, %s7
  $region1: #{ck_forward.1} parent=0
    #allocation2 [shape = 'u8[106496]{0}', space=vmem, size = 0x1a000, scoped, tag = 'output window, operand 0']
    loop: start=0, step=1, limit=4
    $region2: #{ck_forward.1} parent=1 // loop_pre_header
      _
    $region3: #{ck_forward.1} parent=1 // loop_header
      %s12 = sphi 0, %s16
      %p13 = scmp.ge.s32.totalorder %s12, 4
      %s22 = sphi 0, %s24
      %s25 = sphi 0, %s22
      %s26 = sphi 0, %s25
      %s42 = sphi 0, %s26
      %s48 = sphi 0, %s50
      %s51 = sphi 0, %s48
      %s52 = sphi 0, %s51
      %s68 = sphi 0, %s52
      %s72 = sphi 0, %s72
      %s74 = sphi 0, %s72
      %s75 = sphi 0, %s74
      %s89 = sphi 0, %s75
      %s93 = sphi 0, %s93
      %s95 = sphi 0, %s93
      %s96 = sphi 0, %s95
      %s110 = sphi 0, %s96
      %s114 = sphi 0, %s114
      %s116 = sphi 0, %s114
      %s117 = sphi 0, %s116
      %s131 = sphi 0, %s117
      %s135 = sphi 0, %s135
      %s137 = sphi 0, %s135
      %s138 = sphi 0, %s137
      %s152 = sphi 0, %s138
      %s158 = sphi 0, %s160
      %s161 = sphi 0, %s158
      %s162 = sphi 0, %s161
      %s178 = sphi 0, %s162
    $region4: #{ck_forward.1} parent=1 // loop_header_branch
      %15 = sbr.rel (%p13) target = $region8
    $region5: #{ck_forward.1} parent=1 // loop_body
      %s17 = ssub.s32 %s12, 1
      %s18 = ssub.s32 %s12, 2
      %s19 = sadd.s32 %s12, 1
      %s20 = ssub.s32 %s12, %s19
      %p21 = scmp.eq.s32.totalorder %s20, 0
      %s23 = sadd.s32 %s22, 1
      %s24 = scalar_select %p21, %s22, %s23
      %p27 = pneg %p21
      %p28 = scmp.eq.s32.totalorder %s12, 1
      %p29 = por %p27, %p28
      %p30 = scmp.ne.s32.totalorder %s22, %s25
      %p31 = scmp.eq.s32.totalorder %s12, 0
      %p32 = por %p30, %p31
      %p33 = scmp.ne.s32.totalorder %s22, %s25
      %p34 = scmp.eq.s32.totalorder %s17, 1
      %p35 = por %p33, %p34
      %p36 = scmp.ne.s32.totalorder %s25, %s26
      %p37 = scmp.eq.s32.totalorder %s17, 0
      %p38 = por %p36, %p37
      %p39 = scmp.ne.s32.totalorder %s25, %s26
      %p40 = scmp.eq.s32.totalorder %s18, 1
      %p41 = por %p39, %p40
      %p43 = scmp.ne.s32.totalorder %s26, %s42
      %p44 = scmp.eq.s32.totalorder %s18, 0
      %p45 = por %p43, %p44
      %s46 = ssub.s32 %s12, %s19
      %p47 = scmp.eq.s32.totalorder %s46, 0
      %s49 = sadd.s32 %s48, 1
      %s50 = scalar_select %p47, %s48, %s49
      %p53 = pneg %p47
      %p54 = scmp.eq.s32.totalorder %s12, 1
      %p55 = por %p53, %p54
      %p56 = scmp.ne.s32.totalorder %s48, %s51
      %p57 = scmp.eq.s32.totalorder %s12, 0
      %p58 = por %p56, %p57
      %p59 = scmp.ne.s32.totalorder %s48, %s51
      %p60 = scmp.eq.s32.totalorder %s17, 1
      %p61 = por %p59, %p60
      %p62 = scmp.ne.s32.totalorder %s51, %s52
      %p63 = scmp.eq.s32.totalorder %s17, 0
      %p64 = por %p62, %p63
      %p65 = scmp.ne.s32.totalorder %s51, %s52
      %p66 = scmp.eq.s32.totalorder %s18, 1
      %p67 = por %p65, %p66
      %p69 = scmp.ne.s32.totalorder %s52, %s68
      %p70 = scmp.eq.s32.totalorder %s18, 0
      %p71 = por %p69, %p70
      %s73 = sadd.s32 %s72, 1
      %p76 = scmp.eq.s32.totalorder %s12, 1
      %p77 = scmp.ne.s32.totalorder %s72, %s74
      %p78 = scmp.eq.s32.totalorder %s12, 0
      %p79 = por %p77, %p78
      %p80 = scmp.ne.s32.totalorder %s72, %s74
      %p81 = scmp.eq.s32.totalorder %s17, 1
      %p82 = por %p80, %p81
      %p83 = scmp.ne.s32.totalorder %s74, %s75
      %p84 = scmp.eq.s32.totalorder %s17, 0
      %p85 = por %p83, %p84
      %p86 = scmp.ne.s32.totalorder %s74, %s75
      %p87 = scmp.eq.s32.totalorder %s18, 1
      %p88 = por %p86, %p87
      %p90 = scmp.ne.s32.totalorder %s75, %s89
      %p91 = scmp.eq.s32.totalorder %s18, 0
      %p92 = por %p90, %p91
      %s94 = sadd.s32 %s93, 1
      %p97 = scmp.eq.s32.totalorder %s12, 1
      %p98 = scmp.ne.s32.totalorder %s93, %s95
      %p99 = scmp.eq.s32.totalorder %s12, 0
      %p100 = por %p98, %p99
      %p101 = scmp.ne.s32.totalorder %s93, %s95
      %p102 = scmp.eq.s32.totalorder %s17, 1
      %p103 = por %p101, %p102
      %p104 = scmp.ne.s32.totalorder %s95, %s96
      %p105 = scmp.eq.s32.totalorder %s17, 0
      %p106 = por %p104, %p105
      %p107 = scmp.ne.s32.totalorder %s95, %s96
      %p108 = scmp.eq.s32.totalorder %s18, 1
      %p109 = por %p107, %p108
      %p111 = scmp.ne.s32.totalorder %s96, %s110
      %p112 = scmp.eq.s32.totalorder %s18, 0
      %p113 = por %p111, %p112
      %s115 = sadd.s32 %s114, 1
      %p118 = scmp.eq.s32.totalorder %s12, 1
      %p119 = scmp.ne.s32.totalorder %s114, %s116
      %p120 = scmp.eq.s32.totalorder %s12, 0
      %p121 = por %p119, %p120
      %p122 = scmp.ne.s32.totalorder %s114, %s116
      %p123 = scmp.eq.s32.totalorder %s17, 1
      %p124 = por %p122, %p123
      %p125 = scmp.ne.s32.totalorder %s116, %s117
      %p126 = scmp.eq.s32.totalorder %s17, 0
      %p127 = por %p125, %p126
      %p128 = scmp.ne.s32.totalorder %s116, %s117
      %p129 = scmp.eq.s32.totalorder %s18, 1
      %p130 = por %p128, %p129
      %p132 = scmp.ne.s32.totalorder %s117, %s131
      %p133 = scmp.eq.s32.totalorder %s18, 0
      %p134 = por %p132, %p133
      %s136 = sadd.s32 %s135, 1
      %p139 = scmp.eq.s32.totalorder %s12, 1
      %p140 = scmp.ne.s32.totalorder %s135, %s137
      %p141 = scmp.eq.s32.totalorder %s12, 0
      %p142 = por %p140, %p141
      %p143 = scmp.ne.s32.totalorder %s135, %s137
      %p144 = scmp.eq.s32.totalorder %s17, 1
      %p145 = por %p143, %p144
      %p146 = scmp.ne.s32.totalorder %s137, %s138
      %p147 = scmp.eq.s32.totalorder %s17, 0
      %p148 = por %p146, %p147
      %p149 = scmp.ne.s32.totalorder %s137, %s138
      %p150 = scmp.eq.s32.totalorder %s18, 1
      %p151 = por %p149, %p150
      %p153 = scmp.ne.s32.totalorder %s138, %s152
      %p154 = scmp.eq.s32.totalorder %s18, 0
      %p155 = por %p153, %p154
      %s156 = ssub.s32 %s12, %s19
      %p157 = scmp.eq.s32.totalorder %s156, 0
      %s159 = sadd.s32 %s158, 1
      %s160 = scalar_select %p157, %s158, %s159
      %p163 = pneg %p157
      %p164 = scmp.eq.s32.totalorder %s12, 1
      %p165 = por %p163, %p164
      %p166 = scmp.ne.s32.totalorder %s158, %s161
      %p167 = scmp.eq.s32.totalorder %s12, 0
      %p168 = por %p166, %p167
      %p169 = scmp.ne.s32.totalorder %s158, %s161
      %p170 = scmp.eq.s32.totalorder %s17, 1
      %p171 = por %p169, %p170
      %p172 = scmp.ne.s32.totalorder %s161, %s162
      %p173 = scmp.eq.s32.totalorder %s17, 0
      %p174 = por %p172, %p173
      %p175 = scmp.ne.s32.totalorder %s161, %s162
      %p176 = scmp.eq.s32.totalorder %s18, 1
      %p177 = por %p175, %p176
      %p179 = scmp.ne.s32.totalorder %s162, %s178
      %p180 = scmp.eq.s32.totalorder %s18, 0
      %p181 = por %p179, %p180
      %p182 = scmp.le.s32.totalorder 1, %s12
      %p183 = scmp.lt.s32.totalorder %s12, 3
      %p184 = pnand %p182, %p183
      %p185 = pneg %p184
      // Predicated region
      $region9: #{ck_forward.1} parent=5 // pred_check
        _
      $region10: #{ck_forward.1} parent=5 // pred_check_branch
        %187 = sbr.rel (%p184) target = $region12
      $region11: #{ck_forward.1} parent=5 // pred_region
        %s188 = ssub.s32 %s12, 1
        // Predicated region
        $region13: #{ck_forward.1} parent=11 // pred_check
          %p189 = pneg %p85
        $region14: #{ck_forward.1} parent=11 // pred_check_branch
          %191 = sbr.rel (%p189) target = $region16
        $region15: #{ck_forward.1} parent=11 // pred_region
          _
        $region16: #{ck_forward.1} parent=11 // pred_fallthru
          _
        // Predicated region
        $region17: #{ck_forward.1} parent=11 // pred_check
          %p192 = pneg %p106
        $region18: #{ck_forward.1} parent=11 // pred_check_branch
          %194 = sbr.rel (%p192) target = $region20
        $region19: #{ck_forward.1} parent=11 // pred_region
          _
        $region20: #{ck_forward.1} parent=11 // pred_fallthru
          _
        // Predicated region
        $region21: #{ck_forward.1} parent=11 // pred_check
          %p195 = pneg %p127
        $region22: #{ck_forward.1} parent=11 // pred_check_branch
          %197 = sbr.rel (%p195) target = $region24
        $region23: #{ck_forward.1} parent=11 // pred_region
          _
        $region24: #{ck_forward.1} parent=11 // pred_fallthru
          _
        // Predicated region
        $region25: #{ck_forward.1} parent=11 // pred_check
          %p198 = pneg %p148
        $region26: #{ck_forward.1} parent=11 // pred_check_branch
          %200 = sbr.rel (%p198) target = $region28
        $region27: #{ck_forward.1} parent=11 // pred_region
          _
        $region28: #{ck_forward.1} parent=11 // pred_fallthru
          _
      $region12: #{ck_forward.1} parent=5 // pred_fallthru
        _
      %p201 = scmp.lt.s32.totalorder %s12, 2
      // Predicated region
      $region29: #{ck_forward.1} parent=5 // pred_check
        %p202 = pneg %p201
      $region30: #{ck_forward.1} parent=5 // pred_check_branch
        %204 = sbr.rel (%p202) target = $region32
      $region31: #{ck_forward.1} parent=5 // pred_region
        // Predicated region
        $region33: #{ck_forward.1} parent=31 // pred_check
          %p205 = pneg %p32
        $region34: #{ck_forward.1} parent=31 // pred_check_branch
          %207 = sbr.rel (%p205) target = $region36
        $region35: #{ck_forward.1} parent=31 // pred_region
          %s208 = smul.u32 13, %s12
          %s209 = ssub.s32 25, %s208
          %p210 = scmp.lt.s32.totalorder %s209, 13
          %s211 = scalar_select %p210, %s209, 13
          %s212 = smul.u32 4, %s211
          %s213 = smul.u32 %s212, 2
          %p214 = scmp.lt.s32.totalorder %s208, 24
          %s215 = scalar_select %p214, %s208, 24
          %s216 = smul.addr %s215, 2
          %s217 = smul.addr %s216, 4
          %s218 = scalar_lea.vmem %s0, %s217
          %s219 = smul.u32 13, %s12
          %s220 = ssub.s32 25, %s219
          %p221 = scmp.lt.s32.totalorder %s220, 13
          %s222 = scalar_select %p221, %s220, 13
          %s223 = smul.u32 4, %s222
          %s224 = smul.u32 %s223, 2
        $region36: #{ck_forward.1} parent=31 // pred_fallthru
          _
        // Predicated region
        $region37: #{ck_forward.1} parent=31 // pred_check
          %p225 = pneg %p58
        $region38: #{ck_forward.1} parent=31 // pred_check_branch
          %227 = sbr.rel (%p225) target = $region40
        $region39: #{ck_forward.1} parent=31 // pred_region
          %s228 = smul.u32 13, %s12
          %s229 = ssub.s32 25, %s228
          %p230 = scmp.lt.s32.totalorder %s229, 13
          %s231 = scalar_select %p230, %s229, 13
          %s232 = smul.u32 8, %s231
          %p233 = scmp.lt.s32.totalorder %s228, 24
          %s234 = scalar_select %p233, %s228, 24
          %s235 = smul.addr %s234, 8
          %s236 = scalar_lea.vmem %s1, %s235
          %s237 = smul.u32 13, %s12
          %s238 = ssub.s32 25, %s237
          %p239 = scmp.lt.s32.totalorder %s238, 13
          %s240 = scalar_select %p239, %s238, 13
          %s241 = smul.u32 8, %s240
        $region40: #{ck_forward.1} parent=31 // pred_fallthru
          _
      $region32: #{ck_forward.1} parent=5 // pred_fallthru
        _
      %p242 = scmp.le.s32.totalorder 1, %s12
      %p243 = scmp.lt.s32.totalorder %s12, 3
      %p244 = pnand %p242, %p243
      %p245 = pneg %p244
      // Predicated region
      $region41: #{ck_forward.1} parent=5 // pred_check
        _
      $region42: #{ck_forward.1} parent=5 // pred_check_branch
        %247 = sbr.rel (%p244) target = $region44
      $region43: #{ck_forward.1} parent=5 // pred_region
        %s248 = ssub.s32 %s12, 1
        %s249 = smul.u32 13, %s17
        %s250 = ssub.s32 25, %s249
        %p251 = scmp.lt.s32.totalorder %s250, 13
        %s252 = scalar_select %p251, %s250, 13
        %s253 = smul.u32 4, %s252
        %s254 = smul.u32 %s253, 2
        %p255 = scmp.lt.s32.totalorder %s249, 24
        %s256 = scalar_select %p255, %s249, 24
        %s257 = smul.addr %s256, 2
        %s258 = smul.addr %s257, 4
        %s259 = scalar_lea.vmem %s0, %s258
        %p260 = pneg %p38
        %p261 = pneg %p35
        %s262 = smul.u32 13, %s17
        %s263 = ssub.s32 25, %s262
        %p264 = scmp.lt.s32.totalorder %s263, 13
        %s265 = scalar_select %p264, %s263, 13
        %s266 = smul.u32 8, %s265
        %p267 = scmp.lt.s32.totalorder %s262, 24
        %s268 = scalar_select %p267, %s262, 24
        %s269 = smul.addr %s268, 8
        %s270 = scalar_lea.vmem %s1, %s269
        %p271 = pneg %p64
        %p272 = pneg %p61
        %p273 = pneg %p85
        %p274 = pneg %p82
        %p275 = pneg %p106
        %p276 = pneg %p103
        %p277 = pneg %p127
        %p278 = pneg %p124
        %p279 = pneg %p148
        %p280 = pneg %p145
        %p281 = pneg %p174
        %p282 = pneg %p171
        %s283 = sand.u32 %s161, 1
        %s284 = sand.u32 %s161, 1
        %s285 = smul.addr %s284, 104
        %s286 = scalar_lea.vmem [#allocation2], %s285
        %s287 = smul.u32 13, %s17
        %s288 = ssub.s32 25, %s287
        %p289 = scmp.lt.s32.totalorder %s288, 13
        %s290 = scalar_select %p289, %s288, 13
        %s291 = smul.u32 4, %s290
        %s292 = smul.u32 %s291, 2
        %p293 = scmp.lt.s32.totalorder %s287, 24
        %s294 = scalar_select %p293, %s287, 24
        %s295 = smul.addr %s294, 2
        %s296 = smul.addr %s295, 4
        %s297 = scalar_lea.vmem %s0, %s296
        %s298 = smul.u32 13, %s17
        %s299 = ssub.s32 25, %s298
        %p300 = scmp.lt.s32.totalorder %s299, 13
        %s301 = scalar_select %p300, %s299, 13
        %s302 = smul.u32 4, %s301
        %s303 = smul.u32 %s302, 2
        %s304 = smul.u32 13, %s17
        %s305 = ssub.s32 25, %s304
        %p306 = scmp.lt.s32.totalorder %s305, 13
        %s307 = scalar_select %p306, %s305, 13
        %s308 = smul.u32 8, %s307
        %p309 = scmp.lt.s32.totalorder %s304, 24
        %s310 = scalar_select %p309, %s304, 24
        %s311 = smul.addr %s310, 8
        %s312 = scalar_lea.vmem %s1, %s311
        %s313 = smul.u32 13, %s17
        %s314 = ssub.s32 25, %s313
        %p315 = scmp.lt.s32.totalorder %s314, 13
        %s316 = scalar_select %p315, %s314, 13
        %s317 = smul.u32 8, %s316
        %s318 = smul.u32 13, %s17
        %s319 = ssub.s32 25, %s318
        %p320 = scmp.lt.s32.totalorder %s319, 13
        %s321 = scalar_select %p320, %s319, 13
        %s322 = smul.u32 8, %s321
        %v323 = vld [vmem:[%s297] sm:$0xff]
        %v324 = vld [vmem:[%s297 + $0x8] sm:$0xff]
        %v325 = vld [vmem:[%s297 + $0x10] sm:$0xff]
        %v326 = vld [vmem:[%s297 + $0x18] sm:$0xff]
        %v327 = vld [vmem:[%s297 + $0x20] sm:$0xff]
        %v328 = vld [vmem:[%s297 + $0x28] sm:$0xff]
        %v329 = vld [vmem:[%s297 + $0x30] sm:$0xff]
        %v330 = vld [vmem:[%s297 + $0x38] sm:$0xff]
        %v331 = vld [vmem:[%s297 + $0x40] sm:$0xff]
        %v332 = vld [vmem:[%s297 + $0x48] sm:$0xff]
        %v333 = vld [vmem:[%s297 + $0x50] sm:$0xff]
        %v334 = vld [vmem:[%s297 + $0x58] sm:$0xff]
        %v335 = vld [vmem:[%s297 + $0x60] sm:$0xff]
        %v336 = vld [vmem:[%s3] sm:$0xf]
        %v337 = vld [vmem:[%s3 + $0x4] sm:$0xf]
        %v338 = vld [vmem:[%s3 + $0x8] sm:$0xf]
        %v339 = vld [vmem:[%s3 + $0xc] sm:$0xf]
        %v340 = vld [vmem:[%s3 + $0x10] sm:$0xf]
        %v341 = vld [vmem:[%s3 + $0x14] sm:$0xf]
        %v342 = vld [vmem:[%s3 + $0x18] sm:$0xf]
        %v343 = vld [vmem:[%s3 + $0x1c] sm:$0xf]
        %v344 = vld [vmem:[%s3 + $0x20] sm:$0xf]
        %v345 = vld [vmem:[%s3 + $0x24] sm:$0xf]
        %v346 = vld [vmem:[%s3 + $0x28] sm:$0xf]
        %v347 = vld [vmem:[%s3 + $0x2c] sm:$0xf]
        %v348 = vld [vmem:[%s3 + $0x30] sm:$0xf]
        %v349 = vld [vmem:[%s3 + $0x34] sm:$0xf]
        %v350 = vld [vmem:[%s3 + $0x38] sm:$0xf]
        %v351 = vld [vmem:[%s3 + $0x3c] sm:$0xf]
        %v352 = vld [vmem:[%s3 + $0x40] sm:$0xf]
        %v353 = vld [vmem:[%s3 + $0x44] sm:$0xf]
        %v354 = vld [vmem:[%s3 + $0x48] sm:$0xf]
        %v355 = vld [vmem:[%s3 + $0x4c] sm:$0xf]
        %v356 = vld [vmem:[%s3 + $0x50] sm:$0xf]
        %v357 = vld [vmem:[%s3 + $0x54] sm:$0xf]
        %v358 = vld [vmem:[%s3 + $0x58] sm:$0xf]
        %v359 = vld [vmem:[%s3 + $0x5c] sm:$0xf]
        %v360 = vld [vmem:[%s3 + $0x60] sm:$0xf]
        %v361 = vld [vmem:[%s3 + $0x64] sm:$0xf]
        %v362 = vld [vmem:[%s3 + $0x68] sm:$0xf]
        %v363 = vld [vmem:[%s3 + $0x6c] sm:$0xf]
        %v364 = vld [vmem:[%s3 + $0x70] sm:$0xf]
        %v365 = vld [vmem:[%s3 + $0x74] sm:$0xf]
        %v366 = vld [vmem:[%s3 + $0x78] sm:$0xf]
        %v367 = vld [vmem:[%s3 + $0x7c] sm:$0xf]
        %v368 = vld [vmem:[%s312] sm:$0xff]
        %v369 = vld [vmem:[%s312 + $0x8] sm:$0xff]
        %v370 = vld [vmem:[%s312 + $0x10] sm:$0xff]
        %v371 = vld [vmem:[%s312 + $0x18] sm:$0xff]
        %v372 = vld [vmem:[%s312 + $0x20] sm:$0xff]
        %v373 = vld [vmem:[%s312 + $0x28] sm:$0xff]
        %v374 = vld [vmem:[%s312 + $0x30] sm:$0xff]
        %v375 = vld [vmem:[%s312 + $0x38] sm:$0xff]
        %v376 = vld [vmem:[%s312 + $0x40] sm:$0xff]
        %v377 = vld [vmem:[%s312 + $0x48] sm:$0xff]
        %v378 = vld [vmem:[%s312 + $0x50] sm:$0xff]
        %v379 = vld [vmem:[%s312 + $0x58] sm:$0xff]
        %v380 = vld [vmem:[%s312 + $0x60] sm:$0xff]
        %v381 = vld [vmem:[%s2] sm:$0xff]
        %v382 = vld [vmem:[%s2 + $0x8] sm:$0xff]
        %vm383 = vcmask 130048
        %v385 = vsel %vm383, %v368, 0
        %v388 = vsel %vm383, %v369, 0
        %v391 = vsel %vm383, %v370, 0
        %v394 = vsel %vm383, %v371, 0
        %v397 = vsel %vm383, %v372, 0
        %v400 = vsel %vm383, %v373, 0
        %v403 = vsel %vm383, %v374, 0
        %v406 = vsel %vm383, %v375, 0
        %v409 = vsel %vm383, %v376, 0
        %v412 = vsel %vm383, %v377, 0
        %v415 = vsel %vm383, %v378, 0
        %v418 = vsel %vm383, %v379, 0
        %v421 = vsel %vm383, %v380, 0
        %423 = vmatpush.msra.mxu0 0.0
        %424 = vmatpush.msra.mxu0 0.0
        %425 = vmatpush.msra.mxu0 0.0
        %426 = vmatpush.msra.mxu0 0.0
        %427 = vmatpush.msra.mxu0 0.0
        %428 = vmatpush.msra.mxu0 0.0
        %429 = vmatpush.msra.mxu0 0.0
        %430 = vmatpush.msra.mxu0 0.0
        %431 = vmatpush.msra.mxu0 0.0
        %432 = vmatpush.msra.mxu0 0.0
        %433 = vmatpush.msra.mxu0 0.0
        %434 = vmatpush.msra.mxu0 0.0
        %435 = vmatpush.msra.mxu0 0.0
        %436 = vmatpush.msra.mxu0 0.0
        %437 = vmatpush.msra.mxu0 %v382
        %438 = vmatpush.msra.mxu0 %v381
        %439 = vmatmul.f32.gmra.mxu0 %v385
        %v440 = vpop.f32.mrf.mxu0
        %v441 = vadd.f32 0.0, %v440
        %442 = vmatmul.f32.gmra.mxu0 %v388
        %v443 = vpop.f32.mrf.mxu0
        %v444 = vadd.f32 0.0, %v443
        %445 = vmatmul.f32.gmra.mxu0 %v391
        %v446 = vpop.f32.mrf.mxu0
        %v447 = vadd.f32 0.0, %v446
        %448 = vmatmul.f32.gmra.mxu0 %v394
        %v449 = vpop.f32.mrf.mxu0
        %v450 = vadd.f32 0.0, %v449
        %451 = vmatmul.f32.gmra.mxu0 %v397
        %v452 = vpop.f32.mrf.mxu0
        %v453 = vadd.f32 0.0, %v452
        %454 = vmatmul.f32.gmra.mxu0 %v400
        %v455 = vpop.f32.mrf.mxu0
        %v456 = vadd.f32 0.0, %v455
        %457 = vmatmul.f32.gmra.mxu0 %v403
        %v458 = vpop.f32.mrf.mxu0
        %v459 = vadd.f32 0.0, %v458
        %460 = vmatmul.f32.gmra.mxu0 %v406
        %v461 = vpop.f32.mrf.mxu0
        %v462 = vadd.f32 0.0, %v461
        %463 = vmatmul.f32.gmra.mxu0 %v409
        %v464 = vpop.f32.mrf.mxu0
        %v465 = vadd.f32 0.0, %v464
        %466 = vmatmul.f32.gmra.mxu0 %v412
        %v467 = vpop.f32.mrf.mxu0
        %v468 = vadd.f32 0.0, %v467
        %469 = vmatmul.f32.gmra.mxu0 %v415
        %v470 = vpop.f32.mrf.mxu0
        %v471 = vadd.f32 0.0, %v470
        %472 = vmatmul.f32.gmra.mxu0 %v418
        %v473 = vpop.f32.mrf.mxu0
        %v474 = vadd.f32 0.0, %v473
        %475 = vmatmul.f32.gmra.mxu0 %v421
        %v476 = vpop.f32.mrf.mxu0
        %v477 = vadd.f32 0.0, %v476
        %478 = vdwg.mxu0
        %v492 = vunpack.c.l.b16 %v323
        %v493 = vunpack.c.h.b16 %v323
        %v494 = vunpack.c.l.b16 %v324
        %v495 = vunpack.c.h.b16 %v324
        %v496 = vunpack.c.l.b16 %v325
        %v497 = vunpack.c.h.b16 %v325
        %v498 = vunpack.c.l.b16 %v326
        %v499 = vunpack.c.h.b16 %v326
        %v500 = vunpack.c.l.b16 %v327
        %v501 = vunpack.c.h.b16 %v327
        %v502 = vunpack.c.l.b16 %v328
        %v503 = vunpack.c.h.b16 %v328
        %v504 = vunpack.c.l.b16 %v329
        %v505 = vunpack.c.h.b16 %v329
        %v506 = vunpack.c.l.b16 %v330
        %v507 = vunpack.c.h.b16 %v330
        %v508 = vunpack.c.l.b16 %v331
        %v509 = vunpack.c.h.b16 %v331
        %v510 = vunpack.c.l.b16 %v332
        %v511 = vunpack.c.h.b16 %v332
        %v512 = vunpack.c.l.b16 %v333
        %v513 = vunpack.c.h.b16 %v333
        %v514 = vunpack.c.l.b16 %v334
        %v515 = vunpack.c.h.b16 %v334
        %v516 = vunpack.c.l.b16 %v335
        %v517 = vunpack.c.h.b16 %v335
        %v518 = vpack.c.b16 %v494, %v492
        %v519 = vpack.c.b16 %v495, %v493
        %v520 = vpack.c.b16 %v498, %v496
        %v521 = vpack.c.b16 %v499, %v497
        %v522 = vpack.c.b16 %v502, %v500
        %v523 = vpack.c.b16 %v503, %v501
        %v524 = vpack.c.b16 %v506, %v504
        %v525 = vpack.c.b16 %v507, %v505
        %v526 = vpack.c.b16 %v510, %v508
        %v527 = vpack.c.b16 %v511, %v509
        %v528 = vpack.c.b16 %v514, %v512
        %v529 = vpack.c.b16 %v515, %v513
        %v530 = vpack.c.b16 %v516, %v516
        %v531 = vpack.c.b16 %v517, %v517
        %v578 = vunpack.c.l.b16 %v336
        %v579 = vunpack.c.l.b16 %v337
        %v580 = vunpack.c.l.b16 %v338
        %v581 = vunpack.c.l.b16 %v339
        %v582 = vunpack.c.l.b16 %v340
        %v583 = vunpack.c.l.b16 %v341
        %v584 = vunpack.c.l.b16 %v342
        %v585 = vunpack.c.l.b16 %v343
        %v586 = vunpack.c.l.b16 %v344
        %v587 = vunpack.c.l.b16 %v345
        %v588 = vunpack.c.l.b16 %v346
        %v589 = vunpack.c.l.b16 %v347
        %v590 = vunpack.c.l.b16 %v348
        %v591 = vunpack.c.l.b16 %v349
        %v592 = vunpack.c.l.b16 %v350
        %v593 = vunpack.c.l.b16 %v351
        %v594 = vunpack.c.l.b16 %v352
        %v595 = vunpack.c.l.b16 %v353
        %v596 = vunpack.c.l.b16 %v354
        %v597 = vunpack.c.l.b16 %v355
        %v598 = vunpack.c.l.b16 %v356
        %v599 = vunpack.c.l.b16 %v357
        %v600 = vunpack.c.l.b16 %v358
        %v601 = vunpack.c.l.b16 %v359
        %v602 = vunpack.c.l.b16 %v360
        %v603 = vunpack.c.l.b16 %v361
        %v604 = vunpack.c.l.b16 %v362
        %v605 = vunpack.c.l.b16 %v363
        %v606 = vunpack.c.l.b16 %v364
        %v607 = vunpack.c.l.b16 %v365
        %v608 = vunpack.c.l.b16 %v366
        %v609 = vunpack.c.l.b16 %v367
        %v610 = vpack.c.b16 %v579, %v578
        %v611 = vpack.c.b16 %v581, %v580
        %v612 = vpack.c.b16 %v583, %v582
        %v613 = vpack.c.b16 %v585, %v584
        %v614 = vpack.c.b16 %v587, %v586
        %v615 = vpack.c.b16 %v589, %v588
        %v616 = vpack.c.b16 %v591, %v590
        %v617 = vpack.c.b16 %v593, %v592
        %v618 = vpack.c.b16 %v595, %v594
        %v619 = vpack.c.b16 %v597, %v596
        %v620 = vpack.c.b16 %v599, %v598
        %v621 = vpack.c.b16 %v601, %v600
        %v622 = vpack.c.b16 %v603, %v602
        %v623 = vpack.c.b16 %v605, %v604
        %v624 = vpack.c.b16 %v607, %v606
        %v625 = vpack.c.b16 %v609, %v608
        %642 = vmatpush.bf16.msra.mxu0 %v617
        %643 = vmatpush.bf16.msra.mxu0 %v616
        %644 = vmatpush.bf16.msra.mxu0 %v615
        %645 = vmatpush.bf16.msra.mxu0 %v614
        %646 = vmatpush.bf16.msra.mxu0 %v613
        %647 = vmatpush.bf16.msra.mxu0 %v612
        %648 = vmatpush.bf16.msra.mxu0 %v611
        %649 = vmatpush.bf16.msra.mxu0 %v610
        %650 = vmatmul.bf16.gmra.mxu0 %v518
        %v651 = vpop.f32.mrf.mxu0
        %v652 = vadd.f32 %v441, %v651
        %v653 = vpop.f32.mrf.mxu0
        %v654 = vadd.f32 %v444, %v653
        %655 = vmatmul.bf16.gmra.mxu0 %v520
        %v656 = vpop.f32.mrf.mxu0
        %v657 = vadd.f32 %v447, %v656
        %v658 = vpop.f32.mrf.mxu0
        %v659 = vadd.f32 %v450, %v658
        %660 = vmatmul.bf16.gmra.mxu0 %v522
        %v661 = vpop.f32.mrf.mxu0
        %v662 = vadd.f32 %v453, %v661
        %v663 = vpop.f32.mrf.mxu0
        %v664 = vadd.f32 %v456, %v663
        %665 = vmatmul.bf16.gmra.mxu0 %v524
        %v666 = vpop.f32.mrf.mxu0
        %v667 = vadd.f32 %v459, %v666
        %v668 = vpop.f32.mrf.mxu0
        %v669 = vadd.f32 %v462, %v668
        %670 = vmatmul.bf16.gmra.mxu0 %v526
        %v671 = vpop.f32.mrf.mxu0
        %v672 = vadd.f32 %v465, %v671
        %v673 = vpop.f32.mrf.mxu0
        %v674 = vadd.f32 %v468, %v673
        %675 = vmatmul.bf16.gmra.mxu0 %v528
        %v676 = vpop.f32.mrf.mxu0
        %v677 = vadd.f32 %v471, %v676
        %v678 = vpop.f32.mrf.mxu0
        %v679 = vadd.f32 %v474, %v678
        %680 = vmatmul.bf16.gmra.mxu0 %v530
        %v681 = vpop.f32.mrf.mxu0
        %v682 = vadd.f32 %v477, %v681
        %v683 = vpop.f32.mrf.mxu0
        %684 = vdwg.mxu0
        %685 = vmatpush.bf16.msra.mxu0 %v625
        %686 = vmatpush.bf16.msra.mxu0 %v624
        %687 = vmatpush.bf16.msra.mxu0 %v623
        %688 = vmatpush.bf16.msra.mxu0 %v622
        %689 = vmatpush.bf16.msra.mxu0 %v621
        %690 = vmatpush.bf16.msra.mxu0 %v620
        %691 = vmatpush.bf16.msra.mxu0 %v619
        %692 = vmatpush.bf16.msra.mxu0 %v618
        %693 = vmatmul.bf16.gmra.mxu0 %v519
        %v694 = vpop.f32.mrf.mxu0
        %v695 = vadd.f32 %v652, %v694
        %v696 = vpop.f32.mrf.mxu0
        %v697 = vadd.f32 %v654, %v696
        %698 = vmatmul.bf16.gmra.mxu0 %v521
        %v699 = vpop.f32.mrf.mxu0
        %v700 = vadd.f32 %v657, %v699
        %v701 = vpop.f32.mrf.mxu0
        %v702 = vadd.f32 %v659, %v701
        %703 = vmatmul.bf16.gmra.mxu0 %v523
        %v704 = vpop.f32.mrf.mxu0
        %v705 = vadd.f32 %v662, %v704
        %v706 = vpop.f32.mrf.mxu0
        %v707 = vadd.f32 %v664, %v706
        %708 = vmatmul.bf16.gmra.mxu0 %v525
        %v709 = vpop.f32.mrf.mxu0
        %v710 = vadd.f32 %v667, %v709
        %v711 = vpop.f32.mrf.mxu0
        %v712 = vadd.f32 %v669, %v711
        %713 = vmatmul.bf16.gmra.mxu0 %v527
        %v714 = vpop.f32.mrf.mxu0
        %v715 = vadd.f32 %v672, %v714
        %v716 = vpop.f32.mrf.mxu0
        %v717 = vadd.f32 %v674, %v716
        %718 = vmatmul.bf16.gmra.mxu0 %v529
        %v719 = vpop.f32.mrf.mxu0
        %v720 = vadd.f32 %v677, %v719
        %v721 = vpop.f32.mrf.mxu0
        %v722 = vadd.f32 %v679, %v721
        %723 = vmatmul.bf16.gmra.mxu0 %v531
        %v724 = vpop.f32.mrf.mxu0
        %v725 = vadd.f32 %v682, %v724
        %v726 = vpop.f32.mrf.mxu0
        %727 = vdwg.mxu0
        %v728 = vmul.f32 %v695, %v695
        %v729 = vmul.f32 %v697, %v697
        %v730 = vmul.f32 %v700, %v700
        %v731 = vmul.f32 %v702, %v702
        %v732 = vmul.f32 %v705, %v705
        %v733 = vmul.f32 %v707, %v707
        %v734 = vmul.f32 %v710, %v710
        %v735 = vmul.f32 %v712, %v712
        %v736 = vmul.f32 %v715, %v715
        %v737 = vmul.f32 %v717, %v717
        %v738 = vmul.f32 %v720, %v720
        %v739 = vmul.f32 %v722, %v722
        %v740 = vmul.f32 %v725, %v725
        %vm741 = vcmask 261120
        %v742 = vsel %vm741, %v728, 0.0
        %743 = vadd.xlane.f32.xlu0 %v742
        %v744 = vpop.xlane.xlu0 %743
        %v745 = vsel %vm741, %v729, 0.0
        %746 = vadd.xlane.f32.xlu0 %v745
        %v747 = vpop.xlane.xlu0 %746
        %v748 = vsel %vm741, %v730, 0.0
        %749 = vadd.xlane.f32.xlu0 %v748
        %v750 = vpop.xlane.xlu0 %749
        %v751 = vsel %vm741, %v731, 0.0
        %752 = vadd.xlane.f32.xlu0 %v751
        %v753 = vpop.xlane.xlu0 %752
        %v754 = vsel %vm741, %v732, 0.0
        %755 = vadd.xlane.f32.xlu0 %v754
        %v756 = vpop.xlane.xlu0 %755
        %v757 = vsel %vm741, %v733, 0.0
        %758 = vadd.xlane.f32.xlu0 %v757
        %v759 = vpop.xlane.xlu0 %758
        %v760 = vsel %vm741, %v734, 0.0
        %761 = vadd.xlane.f32.xlu0 %v760
        %v762 = vpop.xlane.xlu0 %761
        %v763 = vsel %vm741, %v735, 0.0
        %764 = vadd.xlane.f32.xlu0 %v763
        %v765 = vpop.xlane.xlu0 %764
        %v766 = vsel %vm741, %v736, 0.0
        %767 = vadd.xlane.f32.xlu0 %v766
        %v768 = vpop.xlane.xlu0 %767
        %v769 = vsel %vm741, %v737, 0.0
        %770 = vadd.xlane.f32.xlu0 %v769
        %v771 = vpop.xlane.xlu0 %770
        %v772 = vsel %vm741, %v738, 0.0
        %773 = vadd.xlane.f32.xlu0 %v772
        %v774 = vpop.xlane.xlu0 %773
        %v775 = vsel %vm741, %v739, 0.0
        %776 = vadd.xlane.f32.xlu0 %v775
        %v777 = vpop.xlane.xlu0 %776
        %v778 = vsel %vm741, %v740, 0.0
        %779 = vadd.xlane.f32.xlu0 %v778
        %v780 = vpop.xlane.xlu0 %779
        %v781 = vadd.f32 %v744, 1e-06
        %v782 = vadd.f32 %v747, 1e-06
        %v783 = vadd.f32 %v750, 1e-06
        %v784 = vadd.f32 %v753, 1e-06
        %v785 = vadd.f32 %v756, 1e-06
        %v786 = vadd.f32 %v759, 1e-06
        %v787 = vadd.f32 %v762, 1e-06
        %v788 = vadd.f32 %v765, 1e-06
        %v789 = vadd.f32 %v768, 1e-06
        %v790 = vadd.f32 %v771, 1e-06
        %v791 = vadd.f32 %v774, 1e-06
        %v792 = vadd.f32 %v777, 1e-06
        %v793 = vadd.f32 %v780, 1e-06
        %v794 = vrsqrt.pop %v781
        %v795 = vmul.f32 %v794, %v781
        %v796 = vmul.f32 %v795, %v794
        %v797 = vmul.f32 0.5, %v796
        %v798 = vsub.f32 1.5, %v797
        %v799 = vmul.f32 %v794, %v798
        %vm800 = vweird.f32 %v781
        %vm801 = vweird.f32 %v794
        %vm802 = vmor %vm800, %vm801
        %v803 = vsel %vm802, %v794, %v799
        %v804 = vrsqrt.pop %v782
        %v805 = vmul.f32 %v804, %v782
        %v806 = vmul.f32 %v805, %v804
        %v807 = vmul.f32 0.5, %v806
        %v808 = vsub.f32 1.5, %v807
        %v809 = vmul.f32 %v804, %v808
        %vm810 = vweird.f32 %v782
        %vm811 = vweird.f32 %v804
        %vm812 = vmor %vm810, %vm811
        %v813 = vsel %vm812, %v804, %v809
        %v814 = vrsqrt.pop %v783
        %v815 = vmul.f32 %v814, %v783
        %v816 = vmul.f32 %v815, %v814
        %v817 = vmul.f32 0.5, %v816
        %v818 = vsub.f32 1.5, %v817
        %v819 = vmul.f32 %v814, %v818
        %vm820 = vweird.f32 %v783
        %vm821 = vweird.f32 %v814
        %vm822 = vmor %vm820, %vm821
        %v823 = vsel %vm822, %v814, %v819
        %v824 = vrsqrt.pop %v784
        %v825 = vmul.f32 %v824, %v784
        %v826 = vmul.f32 %v825, %v824
        %v827 = vmul.f32 0.5, %v826
        %v828 = vsub.f32 1.5, %v827
        %v829 = vmul.f32 %v824, %v828
        %vm830 = vweird.f32 %v784
        %vm831 = vweird.f32 %v824
        %vm832 = vmor %vm830, %vm831
        %v833 = vsel %vm832, %v824, %v829
        %v834 = vrsqrt.pop %v785
        %v835 = vmul.f32 %v834, %v785
        %v836 = vmul.f32 %v835, %v834
        %v837 = vmul.f32 0.5, %v836
        %v838 = vsub.f32 1.5, %v837
        %v839 = vmul.f32 %v834, %v838
        %vm840 = vweird.f32 %v785
        %vm841 = vweird.f32 %v834
        %vm842 = vmor %vm840, %vm841
        %v843 = vsel %vm842, %v834, %v839
        %v844 = vrsqrt.pop %v786
        %v845 = vmul.f32 %v844, %v786
        %v846 = vmul.f32 %v845, %v844
        %v847 = vmul.f32 0.5, %v846
        %v848 = vsub.f32 1.5, %v847
        %v849 = vmul.f32 %v844, %v848
        %vm850 = vweird.f32 %v786
        %vm851 = vweird.f32 %v844
        %vm852 = vmor %vm850, %vm851
        %v853 = vsel %vm852, %v844, %v849
        %v854 = vrsqrt.pop %v787
        %v855 = vmul.f32 %v854, %v787
        %v856 = vmul.f32 %v855, %v854
        %v857 = vmul.f32 0.5, %v856
        %v858 = vsub.f32 1.5, %v857
        %v859 = vmul.f32 %v854, %v858
        %vm860 = vweird.f32 %v787
        %vm861 = vweird.f32 %v854
        %vm862 = vmor %vm860, %vm861
        %v863 = vsel %vm862, %v854, %v859
        %v864 = vrsqrt.pop %v788
        %v865 = vmul.f32 %v864, %v788
        %v866 = vmul.f32 %v865, %v864
        %v867 = vmul.f32 0.5, %v866
        %v868 = vsub.f32 1.5, %v867
        %v869 = vmul.f32 %v864, %v868
        %vm870 = vweird.f32 %v788
        %vm871 = vweird.f32 %v864
        %vm872 = vmor %vm870, %vm871
        %v873 = vsel %vm872, %v864, %v869
        %v874 = vrsqrt.pop %v789
        %v875 = vmul.f32 %v874, %v789
        %v876 = vmul.f32 %v875, %v874
        %v877 = vmul.f32 0.5, %v876
        %v878 = vsub.f32 1.5, %v877
        %v879 = vmul.f32 %v874, %v878
        %vm880 = vweird.f32 %v789
        %vm881 = vweird.f32 %v874
        %vm882 = vmor %vm880, %vm881
        %v883 = vsel %vm882, %v874, %v879
        %v884 = vrsqrt.pop %v790
        %v885 = vmul.f32 %v884, %v790
        %v886 = vmul.f32 %v885, %v884
        %v887 = vmul.f32 0.5, %v886
        %v888 = vsub.f32 1.5, %v887
        %v889 = vmul.f32 %v884, %v888
        %vm890 = vweird.f32 %v790
        %vm891 = vweird.f32 %v884
        %vm892 = vmor %vm890, %vm891
        %v893 = vsel %vm892, %v884, %v889
        %v894 = vrsqrt.pop %v791
        %v895 = vmul.f32 %v894, %v791
        %v896 = vmul.f32 %v895, %v894
        %v897 = vmul.f32 0.5, %v896
        %v898 = vsub.f32 1.5, %v897
        %v899 = vmul.f32 %v894, %v898
        %vm900 = vweird.f32 %v791
        %vm901 = vweird.f32 %v894
        %vm902 = vmor %vm900, %vm901
        %v903 = vsel %vm902, %v894, %v899
        %v904 = vrsqrt.pop %v792
        %v905 = vmul.f32 %v904, %v792
        %v906 = vmul.f32 %v905, %v904
        %v907 = vmul.f32 0.5, %v906
        %v908 = vsub.f32 1.5, %v907
        %v909 = vmul.f32 %v904, %v908
        %vm910 = vweird.f32 %v792
        %vm911 = vweird.f32 %v904
        %vm912 = vmor %vm910, %vm911
        %v913 = vsel %vm912, %v904, %v909
        %v914 = vrsqrt.pop %v793
        %v915 = vmul.f32 %v914, %v793
        %v916 = vmul.f32 %v915, %v914
        %v917 = vmul.f32 0.5, %v916
        %v918 = vsub.f32 1.5, %v917
        %v919 = vmul.f32 %v914, %v918
        %vm920 = vweird.f32 %v793
        %vm921 = vweird.f32 %v914
        %vm922 = vmor %vm920, %vm921
        %v923 = vsel %vm922, %v914, %v919
        %v924 = vmul.f32 %v781, %v803
        %v925 = vmul.f32 %v782, %v813
        %v926 = vmul.f32 %v783, %v823
        %v927 = vmul.f32 %v784, %v833
        %v928 = vmul.f32 %v785, %v843
        %v929 = vmul.f32 %v786, %v853
        %v930 = vmul.f32 %v787, %v863
        %v931 = vmul.f32 %v788, %v873
        %v932 = vmul.f32 %v789, %v883
        %v933 = vmul.f32 %v790, %v893
        %v934 = vmul.f32 %v791, %v903
        %v935 = vmul.f32 %v792, %v913
        %v936 = vmul.f32 %v793, %v923
        %v937 = vsub.f32 0.0, %v924
        %v938 = vsub.f32 0.0, %v925
        %v939 = vsub.f32 0.0, %v926
        %v940 = vsub.f32 0.0, %v927
        %v941 = vsub.f32 0.0, %v928
        %v942 = vsub.f32 0.0, %v929
        %v943 = vsub.f32 0.0, %v930
        %v944 = vsub.f32 0.0, %v931
        %v945 = vsub.f32 0.0, %v932
        %v946 = vsub.f32 0.0, %v933
        %v947 = vsub.f32 0.0, %v934
        %v948 = vsub.f32 0.0, %v935
        %v949 = vsub.f32 0.0, %v936
        %v950 = vmul.f32 %v937, 1.442695
        %v951 = vpow.pop %v950
        %v952 = vmul.f32 %v938, 1.442695
        %v953 = vpow.pop %v952
        %v954 = vmul.f32 %v939, 1.442695
        %v955 = vpow.pop %v954
        %v956 = vmul.f32 %v940, 1.442695
        %v957 = vpow.pop %v956
        %v958 = vmul.f32 %v941, 1.442695
        %v959 = vpow.pop %v958
        %v960 = vmul.f32 %v942, 1.442695
        %v961 = vpow.pop %v960
        %v962 = vmul.f32 %v943, 1.442695
        %v963 = vpow.pop %v962
        %v964 = vmul.f32 %v944, 1.442695
        %v965 = vpow.pop %v964
        %v966 = vmul.f32 %v945, 1.442695
        %v967 = vpow.pop %v966
        %v968 = vmul.f32 %v946, 1.442695
        %v969 = vpow.pop %v968
        %v970 = vmul.f32 %v947, 1.442695
        %v971 = vpow.pop %v970
        %v972 = vmul.f32 %v948, 1.442695
        %v973 = vpow.pop %v972
        %v974 = vmul.f32 %v949, 1.442695
        %v975 = vpow.pop %v974
        %v976 = vadd.f32 %v951, 1.0
        %v977 = vadd.f32 %v953, 1.0
        %v978 = vadd.f32 %v955, 1.0
        %v979 = vadd.f32 %v957, 1.0
        %v980 = vadd.f32 %v959, 1.0
        %v981 = vadd.f32 %v961, 1.0
        %v982 = vadd.f32 %v963, 1.0
        %v983 = vadd.f32 %v965, 1.0
        %v984 = vadd.f32 %v967, 1.0
        %v985 = vadd.f32 %v969, 1.0
        %v986 = vadd.f32 %v971, 1.0
        %v987 = vadd.f32 %v973, 1.0
        %v988 = vadd.f32 %v975, 1.0
        %v989 = vrcp.pop %v976
        %v990 = vrcp.pop %v977
        %v991 = vrcp.pop %v978
        %v992 = vrcp.pop %v979
        %v993 = vrcp.pop %v980
        %v994 = vrcp.pop %v981
        %v995 = vrcp.pop %v982
        %v996 = vrcp.pop %v983
        %v997 = vrcp.pop %v984
        %v998 = vrcp.pop %v985
        %v999 = vrcp.pop %v986
        %v1000 = vrcp.pop %v987
        %v1001 = vrcp.pop %v988
        %v1002 = vmul.f32 %v989, %v803
        %v1003 = vmul.f32 %v990, %v813
        %v1004 = vmul.f32 %v991, %v823
        %v1005 = vmul.f32 %v992, %v833
        %v1006 = vmul.f32 %v993, %v843
        %v1007 = vmul.f32 %v994, %v853
        %v1008 = vmul.f32 %v995, %v863
        %v1009 = vmul.f32 %v996, %v873
        %v1010 = vmul.f32 %v997, %v883
        %v1011 = vmul.f32 %v998, %v893
        %v1012 = vmul.f32 %v999, %v903
        %v1013 = vmul.f32 %v1000, %v913
        %v1014 = vmul.f32 %v1001, %v923
        %v1015 = vmul.f32 %v695, %v1002
        %v1016 = vmul.f32 %v697, %v1003
        %v1017 = vmul.f32 %v700, %v1004
        %v1018 = vmul.f32 %v702, %v1005
        %v1019 = vmul.f32 %v705, %v1006
        %v1020 = vmul.f32 %v707, %v1007
        %v1021 = vmul.f32 %v710, %v1008
        %v1022 = vmul.f32 %v712, %v1009
        %v1023 = vmul.f32 %v715, %v1010
        %v1024 = vmul.f32 %v717, %v1011
        %v1025 = vmul.f32 %v720, %v1012
        %v1026 = vmul.f32 %v722, %v1013
        %v1027 = vmul.f32 %v725, %v1014
        %v1028 = vld [vmem:[%s4] sm:$0xff]
        %v1029 = vld [vmem:[%s4 + $0x8] sm:$0xff]
        %v1030 = vld [vmem:[%s4 + $0x10] sm:$0xff]
        %v1031 = vld [vmem:[%s4 + $0x18] sm:$0xff]
        %v1032 = vld [vmem:[%s4 + $0x20] sm:$0xff]
        %v1033 = vld [vmem:[%s4 + $0x28] sm:$0xff]
        %v1034 = vld [vmem:[%s4 + $0x30] sm:$0xff]
        %v1035 = vld [vmem:[%s4 + $0x38] sm:$0xff]
        %v1036 = vld [vmem:[%s4 + $0x40] sm:$0xff]
        %v1037 = vld [vmem:[%s4 + $0x48] sm:$0xff]
        %v1038 = vld [vmem:[%s4 + $0x50] sm:$0xff]
        %v1039 = vld [vmem:[%s4 + $0x58] sm:$0xff]
        %v1040 = vld [vmem:[%s4 + $0x60] sm:$0xff]
        %v1041 = vld [vmem:[%s4 + $0x68] sm:$0xff]
        %v1042 = vld [vmem:[%s4 + $0x70] sm:$0xff]
        %v1043 = vld [vmem:[%s4 + $0x78] sm:$0xff]
        %v1044 = vmul.f32 %v1015, %v1015
        %v1045 = vmul.f32 %v1016, %v1016
        %v1046 = vmul.f32 %v1017, %v1017
        %v1047 = vmul.f32 %v1018, %v1018
        %v1048 = vmul.f32 %v1019, %v1019
        %v1049 = vmul.f32 %v1020, %v1020
        %v1050 = vmul.f32 %v1021, %v1021
        %v1051 = vmul.f32 %v1022, %v1022
        %v1052 = vmul.f32 %v1023, %v1023
        %v1053 = vmul.f32 %v1024, %v1024
        %v1054 = vmul.f32 %v1025, %v1025
        %v1055 = vmul.f32 %v1026, %v1026
        %v1056 = vmul.f32 %v1027, %v1027
        %v1057 = vsel %vm741, %v1044, 0.0
        %1058 = vadd.xlane.f32.xlu0 %v1057
        %v1059 = vpop.xlane.xlu0 %1058
        %v1060 = vsel %vm741, %v1045, 0.0
        %1061 = vadd.xlane.f32.xlu0 %v1060
        %v1062 = vpop.xlane.xlu0 %1061
        %v1063 = vsel %vm741, %v1046, 0.0
        %1064 = vadd.xlane.f32.xlu0 %v1063
        %v1065 = vpop.xlane.xlu0 %1064
        %v1066 = vsel %vm741, %v1047, 0.0
        %1067 = vadd.xlane.f32.xlu0 %v1066
        %v1068 = vpop.xlane.xlu0 %1067
        %v1069 = vsel %vm741, %v1048, 0.0
        %1070 = vadd.xlane.f32.xlu0 %v1069
        %v1071 = vpop.xlane.xlu0 %1070
        %v1072 = vsel %vm741, %v1049, 0.0
        %1073 = vadd.xlane.f32.xlu0 %v1072
        %v1074 = vpop.xlane.xlu0 %1073
        %v1075 = vsel %vm741, %v1050, 0.0
        %1076 = vadd.xlane.f32.xlu0 %v1075
        %v1077 = vpop.xlane.xlu0 %1076
        %v1078 = vsel %vm741, %v1051, 0.0
        %1079 = vadd.xlane.f32.xlu0 %v1078
        %v1080 = vpop.xlane.xlu0 %1079
        %v1081 = vsel %vm741, %v1052, 0.0
        %1082 = vadd.xlane.f32.xlu0 %v1081
        %v1083 = vpop.xlane.xlu0 %1082
        %v1084 = vsel %vm741, %v1053, 0.0
        %1085 = vadd.xlane.f32.xlu0 %v1084
        %v1086 = vpop.xlane.xlu0 %1085
        %v1087 = vsel %vm741, %v1054, 0.0
        %1088 = vadd.xlane.f32.xlu0 %v1087
        %v1089 = vpop.xlane.xlu0 %1088
        %v1090 = vsel %vm741, %v1055, 0.0
        %1091 = vadd.xlane.f32.xlu0 %v1090
        %v1092 = vpop.xlane.xlu0 %1091
        %v1093 = vsel %vm741, %v1056, 0.0
        %1094 = vadd.xlane.f32.xlu0 %v1093
        %v1095 = vpop.xlane.xlu0 %1094
        %v1097 = vsel %vm741, %v1015, 0
        %v1100 = vsel %vm741, %v1016, 0
        %v1103 = vsel %vm741, %v1017, 0
        %v1106 = vsel %vm741, %v1018, 0
        %v1109 = vsel %vm741, %v1019, 0
        %v1112 = vsel %vm741, %v1020, 0
        %v1115 = vsel %vm741, %v1021, 0
        %v1118 = vsel %vm741, %v1022, 0
        %v1121 = vsel %vm741, %v1023, 0
        %v1124 = vsel %vm741, %v1024, 0
        %v1127 = vsel %vm741, %v1025, 0
        %v1130 = vsel %vm741, %v1026, 0
        %v1133 = vsel %vm741, %v1027, 0
        %v1136 = vsel %vm741, %v1028, 0
        %v1139 = vsel %vm741, %v1029, 0
        %v1142 = vsel %vm741, %v1030, 0
        %v1145 = vsel %vm741, %v1031, 0
        %v1148 = vsel %vm741, %v1032, 0
        %v1151 = vsel %vm741, %v1033, 0
        %v1154 = vsel %vm741, %v1034, 0
        %v1157 = vsel %vm741, %v1035, 0
        %v1160 = vsel %vm741, %v1036, 0
        %v1163 = vsel %vm741, %v1037, 0
        %v1166 = vsel %vm741, %v1038, 0
        %v1169 = vsel %vm741, %v1039, 0
        %v1172 = vsel %vm741, %v1040, 0
        %v1175 = vsel %vm741, %v1041, 0
        %v1178 = vsel %vm741, %v1042, 0
        %v1181 = vsel %vm741, %v1043, 0
        %1183 = vmatpush.xpose.msra.mxu0 %v1181
        %1184 = vmatpush.xpose.msra.mxu0 %v1178
        %1185 = vmatpush.xpose.msra.mxu0 %v1175
        %1186 = vmatpush.xpose.msra.mxu0 %v1172
        %1187 = vmatpush.xpose.msra.mxu0 %v1169
        %1188 = vmatpush.xpose.msra.mxu0 %v1166
        %1189 = vmatpush.xpose.msra.mxu0 %v1163
        %1190 = vmatpush.xpose.msra.mxu0 %v1160
        %1191 = vmatpush.xpose.msra.mxu0 %v1157
        %1192 = vmatpush.xpose.msra.mxu0 %v1154
        %1193 = vmatpush.xpose.msra.mxu0 %v1151
        %1194 = vmatpush.xpose.msra.mxu0 %v1148
        %1195 = vmatpush.xpose.msra.mxu0 %v1145
        %1196 = vmatpush.xpose.msra.mxu0 %v1142
        %1197 = vmatpush.xpose.msra.mxu0 %v1139
        %1198 = vmatpush.xpose.msra.mxu0 %v1136
        %1199 = vmatmul.f32.gmra.mxu0 %v1097
        %v1200 = vpop.f32.mrf.mxu0
        %v1201 = vadd.f32 0.0, %v1200
        %1202 = vmatmul.f32.gmra.mxu0 %v1100
        %v1203 = vpop.f32.mrf.mxu0
        %v1204 = vadd.f32 0.0, %v1203
        %1205 = vmatmul.f32.gmra.mxu0 %v1103
        %v1206 = vpop.f32.mrf.mxu0
        %v1207 = vadd.f32 0.0, %v1206
        %1208 = vmatmul.f32.gmra.mxu0 %v1106
        %v1209 = vpop.f32.mrf.mxu0
        %v1210 = vadd.f32 0.0, %v1209
        %1211 = vmatmul.f32.gmra.mxu0 %v1109
        %v1212 = vpop.f32.mrf.mxu0
        %v1213 = vadd.f32 0.0, %v1212
        %1214 = vmatmul.f32.gmra.mxu0 %v1112
        %v1215 = vpop.f32.mrf.mxu0
        %v1216 = vadd.f32 0.0, %v1215
        %1217 = vmatmul.f32.gmra.mxu0 %v1115
        %v1218 = vpop.f32.mrf.mxu0
        %v1219 = vadd.f32 0.0, %v1218
        %1220 = vmatmul.f32.gmra.mxu0 %v1118
        %v1221 = vpop.f32.mrf.mxu0
        %v1222 = vadd.f32 0.0, %v1221
        %1223 = vmatmul.f32.gmra.mxu0 %v1121
        %v1224 = vpop.f32.mrf.mxu0
        %v1225 = vadd.f32 0.0, %v1224
        %1226 = vmatmul.f32.gmra.mxu0 %v1124
        %v1227 = vpop.f32.mrf.mxu0
        %v1228 = vadd.f32 0.0, %v1227
        %1229 = vmatmul.f32.gmra.mxu0 %v1127
        %v1230 = vpop.f32.mrf.mxu0
        %v1231 = vadd.f32 0.0, %v1230
        %1232 = vmatmul.f32.gmra.mxu0 %v1130
        %v1233 = vpop.f32.mrf.mxu0
        %v1234 = vadd.f32 0.0, %v1233
        %1235 = vmatmul.f32.gmra.mxu0 %v1133
        %v1236 = vpop.f32.mrf.mxu0
        %v1237 = vadd.f32 0.0, %v1236
        %1238 = vdwg.mxu0
        %v1239 = vmul.f32 %v1059, 0.5
        %v1240 = vmul.f32 %v1062, 0.5
        %v1241 = vmul.f32 %v1065, 0.5
        %v1242 = vmul.f32 %v1068, 0.5
        %v1243 = vmul.f32 %v1071, 0.5
        %v1244 = vmul.f32 %v1074, 0.5
        %v1245 = vmul.f32 %v1077, 0.5
        %v1246 = vmul.f32 %v1080, 0.5
        %v1247 = vmul.f32 %v1083, 0.5
        %v1248 = vmul.f32 %v1086, 0.5
        %v1249 = vmul.f32 %v1089, 0.5
        %v1250 = vmul.f32 %v1092, 0.5
        %v1251 = vmul.f32 %v1095, 0.5
        %v1252 = vsub.f32 %v1201, %v1239
        %v1253 = vsub.f32 %v1204, %v1240
        %v1254 = vsub.f32 %v1207, %v1241
        %v1255 = vsub.f32 %v1210, %v1242
        %v1256 = vsub.f32 %v1213, %v1243
        %v1257 = vsub.f32 %v1216, %v1244
        %v1258 = vsub.f32 %v1219, %v1245
        %v1259 = vsub.f32 %v1222, %v1246
        %v1260 = vsub.f32 %v1225, %v1247
        %v1261 = vsub.f32 %v1228, %v1248
        %v1262 = vsub.f32 %v1231, %v1249
        %v1263 = vsub.f32 %v1234, %v1250
        %v1264 = vsub.f32 %v1237, %v1251
        %v1265 = vld [vmem:[%s5] sm:$0x1]
        %v1266 = vmul.f32 %v1265, 0.5
        %v1268 = vperm.slane %v1266, 0
        %v1270 = vsub.f32 %v1252, %v1268
        %v1271 = vsub.f32 %v1253, %v1268
        %v1272 = vsub.f32 %v1254, %v1268
        %v1273 = vsub.f32 %v1255, %v1268
        %v1274 = vsub.f32 %v1256, %v1268
        %v1275 = vsub.f32 %v1257, %v1268
        %v1276 = vsub.f32 %v1258, %v1268
        %v1277 = vsub.f32 %v1259, %v1268
        %v1278 = vsub.f32 %v1260, %v1268
        %v1279 = vsub.f32 %v1261, %v1268
        %v1280 = vsub.f32 %v1262, %v1268
        %v1281 = vsub.f32 %v1263, %v1268
        %v1282 = vsub.f32 %v1264, %v1268
        %v1283 = vmul.f32 %v1270, 1.442695
        %v1284 = vpow.pop %v1283
        %v1285 = vmul.f32 %v1271, 1.442695
        %v1286 = vpow.pop %v1285
        %v1287 = vmul.f32 %v1272, 1.442695
        %v1288 = vpow.pop %v1287
        %v1289 = vmul.f32 %v1273, 1.442695
        %v1290 = vpow.pop %v1289
        %v1291 = vmul.f32 %v1274, 1.442695
        %v1292 = vpow.pop %v1291
        %v1293 = vmul.f32 %v1275, 1.442695
        %v1294 = vpow.pop %v1293
        %v1295 = vmul.f32 %v1276, 1.442695
        %v1296 = vpow.pop %v1295
        %v1297 = vmul.f32 %v1277, 1.442695
        %v1298 = vpow.pop %v1297
        %v1299 = vmul.f32 %v1278, 1.442695
        %v1300 = vpow.pop %v1299
        %v1301 = vmul.f32 %v1279, 1.442695
        %v1302 = vpow.pop %v1301
        %v1303 = vmul.f32 %v1280, 1.442695
        %v1304 = vpow.pop %v1303
        %v1305 = vmul.f32 %v1281, 1.442695
        %v1306 = vpow.pop %v1305
        %v1307 = vmul.f32 %v1282, 1.442695
        %v1308 = vpow.pop %v1307
        %v1309 = vmul.f32 %v1284, %v1201
        %v1310 = vmul.f32 %v1286, %v1204
        %v1311 = vmul.f32 %v1288, %v1207
        %v1312 = vmul.f32 %v1290, %v1210
        %v1313 = vmul.f32 %v1292, %v1213
        %v1314 = vmul.f32 %v1294, %v1216
        %v1315 = vmul.f32 %v1296, %v1219
        %v1316 = vmul.f32 %v1298, %v1222
        %v1317 = vmul.f32 %v1300, %v1225
        %v1318 = vmul.f32 %v1302, %v1228
        %v1319 = vmul.f32 %v1304, %v1231
        %v1320 = vmul.f32 %v1306, %v1234
        %v1321 = vmul.f32 %v1308, %v1237
        %1322 = vst [vmem:[%s286] sm:$0xff] %v1309
        %1323 = vst [vmem:[%s286 + $0x8] sm:$0xff] %v1310
        %1324 = vst [vmem:[%s286 + $0x10] sm:$0xff] %v1311
        %1325 = vst [vmem:[%s286 + $0x18] sm:$0xff] %v1312
        %1326 = vst [vmem:[%s286 + $0x20] sm:$0xff] %v1313
        %1327 = vst [vmem:[%s286 + $0x28] sm:$0xff] %v1314
        %1328 = vst [vmem:[%s286 + $0x30] sm:$0xff] %v1315
        %1329 = vst [vmem:[%s286 + $0x38] sm:$0xff] %v1316
        %1330 = vst [vmem:[%s286 + $0x40] sm:$0xff] %v1317
        %1331 = vst [vmem:[%s286 + $0x48] sm:$0xff] %v1318
        %1332 = vst [vmem:[%s286 + $0x50] sm:$0xff] %v1319
        %1333 = vst [vmem:[%s286 + $0x58] sm:$0xff] %v1320
        %1334 = vst [vmem:[%s286 + $0x60] sm:$0xff] %v1321
        %s1335 = sand.u32 %s161, 1
        %s1336 = sand.u32 %s161, 1
        %s1337 = smul.addr %s1336, 104
        %s1338 = scalar_lea.vmem [#allocation2], %s1337
        // Predicated region
        $region45: #{ck_forward.1} parent=43 // pred_check
          %p1339 = pneg %p171
        $region46: #{ck_forward.1} parent=43 // pred_check_branch
          %1341 = sbr.rel (%p1339) target = $region48
        $region47: #{ck_forward.1} parent=43 // pred_region
          %s1342 = smul.u32 13, %s17
          %s1343 = ssub.s32 25, %s1342
          %p1344 = scmp.lt.s32.totalorder %s1343, 13
          %s1345 = scalar_select %p1344, %s1343, 13
          %s1346 = smul.u32 8, %s1345
          %p1347 = scmp.ne.s32.totalorder 0, %s1346
          %s1348 = smul.addr %s1342, 8
          %s1349 = scalar_lea.vmem %s6, %s1348
          // Predicated region
          $region49: #{ck_forward.1} parent=47 // pred_check
            %p1350 = pneg %p1347
          $region50: #{ck_forward.1} parent=47 // pred_check_branch
            %1352 = sbr.rel (%p1350) target = $region52
          $region51: #{ck_forward.1} parent=47 // pred_region
            // Predicated region
            $region53: #{ck_forward.1} parent=51 // pred_check
              _
            $region54: #{ck_forward.1} parent=51 // pred_check_branch
              %1354 = sbr.rel (0) target = $region56
            $region55: #{ck_forward.1} parent=51 // pred_region
              // Predicated region
              $region75: #{ck_forward.1} parent=55 // pred_check
                _
              $region76: #{ck_forward.1} parent=55 // pred_check_branch
                %1429 = sbr.rel (0) target = $region78
              $region77: #{ck_forward.1} parent=55 // pred_region
                %s1430 = sdiv.u32.pop %s1345, 13
                %s1431 = srem.u32.pop %s1345, 13
                // While loop
                $region79: #{ck_forward.1} parent=77 // loop_pre_header
                  _
                $region80: #{ck_forward.1} parent=77 // loop_header
                  %s1433 = sphi 0, %s1435
                  %p1434 = scmp.ge.s32.totalorder %s1433, %s1430
                  %s1438 = sphi 0, %s1469
                  %s1439 = sphi %s1338, %s1472
                  %s1440 = sphi %s1349, %s1473
                $region81: #{ck_forward.1} parent=77 // loop_header_branch
                  %1437 = sbr.rel (%p1434) target = $region85
                $region82: #{ck_forward.1} parent=77 // loop_body
                  %v1441 = vld [vmem:[%s1439] sm:$0xff]
                  %1442 = vst [vmem:[%s1440] sm:$0xff] %v1441
                  %v1443 = vld [vmem:[%s1439 + $0x8] sm:$0xff]
                  %1444 = vst [vmem:[%s1440 + $0x8] sm:$0xff] %v1443
                  %v1445 = vld [vmem:[%s1439 + $0x10] sm:$0xff]
                  %1446 = vst [vmem:[%s1440 + $0x10] sm:$0xff] %v1445
                  %v1447 = vld [vmem:[%s1439 + $0x18] sm:$0xff]
                  %1448 = vst [vmem:[%s1440 + $0x18] sm:$0xff] %v1447
                  %v1449 = vld [vmem:[%s1439 + $0x20] sm:$0xff]
                  %1450 = vst [vmem:[%s1440 + $0x20] sm:$0xff] %v1449
                  %v1451 = vld [vmem:[%s1439 + $0x28] sm:$0xff]
                  %1452 = vst [vmem:[%s1440 + $0x28] sm:$0xff] %v1451
                  %v1453 = vld [vmem:[%s1439 + $0x30] sm:$0xff]
                  %1454 = vst [vmem:[%s1440 + $0x30] sm:$0xff] %v1453
                  %v1455 = vld [vmem:[%s1439 + $0x38] sm:$0xff]
                  %1456 = vst [vmem:[%s1440 + $0x38] sm:$0xff] %v1455
                  %v1457 = vld [vmem:[%s1439 + $0x40] sm:$0xff]
                  %1458 = vst [vmem:[%s1440 + $0x40] sm:$0xff] %v1457
                  %v1459 = vld [vmem:[%s1439 + $0x48] sm:$0xff]
                  %1460 = vst [vmem:[%s1440 + $0x48] sm:$0xff] %v1459
                  %v1461 = vld [vmem:[%s1439 + $0x50] sm:$0xff]
                  %1462 = vst [vmem:[%s1440 + $0x50] sm:$0xff] %v1461
                  %v1463 = vld [vmem:[%s1439 + $0x58] sm:$0xff]
                  %1464 = vst [vmem:[%s1440 + $0x58] sm:$0xff] %v1463
                  %v1465 = vld [vmem:[%s1439 + $0x60] sm:$0xff]
                  %1466 = vst [vmem:[%s1440 + $0x60] sm:$0xff] %v1465
                  %s1467 = sadd.s32 1, %s1438
                  %p1468 = scmp.ge.s32.totalorder %s1467, %s1430
                  %s1469 = scalar_select %p1468, 0, %s1467
                  %s1470 = smul.u32 %s1469, 104
                  %s1471 = smul.u32 %s1469, 104
                  %s1472 = scalar_lea.vmem %s1338, %s1470 [#allocation2]
                  %s1473 = scalar_lea.vmem %s1349, %s1471
                $region83: #{ck_forward.1} parent=77 // loop_footer
                  %s1435 = sadd.s32 %s1433, 1
                $region84: #{ck_forward.1} parent=77 // loop_footer_branch
                  %1432 = sbr.rel target = $region80
                $region85: #{ck_forward.1} parent=77 // loop_exit
                  _
                %s1474 = sdiv.u32.pop %s1345, 13
                %s1475 = srem.u32.pop %s1345, 13
                %s1476 = smul.u32 %s1474, 13
                %s1477 = smul.u32 8, %s1476
                %s1478 = scalar_lea.vmem %s1338, %s1477 [#allocation2]
                %s1479 = smul.u32 8, %s1476
                %s1480 = scalar_lea.vmem %s1349, %s1479
                // While loop
                $region86: #{ck_forward.1} parent=77 // loop_pre_header
                  _
                $region87: #{ck_forward.1} parent=77 // loop_header
                  %s1482 = sphi 0, %s1484
                  %p1483 = scmp.ge.s32.totalorder %s1482, %s1475
                  %s1487 = sphi 0, %s1494
                  %s1488 = sphi %s1478, %s1497
                  %s1489 = sphi %s1480, %s1498
                $region88: #{ck_forward.1} parent=77 // loop_header_branch
                  %1486 = sbr.rel (%p1483) target = $region92
                $region89: #{ck_forward.1} parent=77 // loop_body
                  %v1490 = vld [vmem:[%s1488] sm:$0xff]
                  %1491 = vst [vmem:[%s1489] sm:$0xff] %v1490
                  %s1492 = sadd.s32 1, %s1487
                  %p1493 = scmp.ge.s32.totalorder %s1492, %s1475
                  %s1494 = scalar_select %p1493, 0, %s1492
                  %s1495 = smul.u32 %s1494, 8
                  %s1496 = smul.u32 %s1494, 8
                  %s1497 = scalar_lea.vmem %s1478, %s1495 [#allocation2]
                  %s1498 = scalar_lea.vmem %s1480, %s1496
                $region90: #{ck_forward.1} parent=77 // loop_footer
                  %s1484 = sadd.s32 %s1482, 1
                $region91: #{ck_forward.1} parent=77 // loop_footer_branch
                  %1481 = sbr.rel target = $region87
                $region92: #{ck_forward.1} parent=77 // loop_exit
                  _
              $region78: #{ck_forward.1} parent=55 // pred_fallthru
                _
              // Predicated region
              $region93: #{ck_forward.1} parent=55 // pred_check
                _
              $region94: #{ck_forward.1} parent=55 // pred_check_branch
                %1500 = sbr.rel target = $region96
              $region95: #{ck_forward.1} parent=55 // pred_region
                _
              $region96: #{ck_forward.1} parent=55 // pred_fallthru
                _
            $region56: #{ck_forward.1} parent=51 // pred_fallthru
              _
            // Predicated region
            $region57: #{ck_forward.1} parent=51 // pred_check
              _
            $region58: #{ck_forward.1} parent=51 // pred_check_branch
              %1356 = sbr.rel target = $region60
            $region59: #{ck_forward.1} parent=51 // pred_region
              %s1358 = ssub.s32 256, 1
              %s1359 = sdiv.u32.pop %s1345, 13
              %s1360 = srem.u32.pop %s1345, 13
              // While loop
              $region61: #{ck_forward.1} parent=59 // loop_pre_header
                _
              $region62: #{ck_forward.1} parent=59 // loop_header
                %s1362 = sphi 0, %s1364
                %p1363 = scmp.ge.s32.totalorder %s1362, %s1359
                %s1367 = sphi 0, %s1398
                %s1368 = sphi %s1338, %s1401
                %s1369 = sphi %s1349, %s1402
              $region63: #{ck_forward.1} parent=59 // loop_header_branch
                %1366 = sbr.rel (%p1363) target = $region67
              $region64: #{ck_forward.1} parent=59 // loop_body
                %v1370 = vld [vmem:[%s1368] sm:%s1358]
                %1371 = vst [vmem:[%s1369] sm:%s1358] %v1370
                %v1372 = vld [vmem:[%s1368 + $0x8] sm:%s1358]
                %1373 = vst [vmem:[%s1369 + $0x8] sm:%s1358] %v1372
                %v1374 = vld [vmem:[%s1368 + $0x10] sm:%s1358]
                %1375 = vst [vmem:[%s1369 + $0x10] sm:%s1358] %v1374
                %v1376 = vld [vmem:[%s1368 + $0x18] sm:%s1358]
                %1377 = vst [vmem:[%s1369 + $0x18] sm:%s1358] %v1376
                %v1378 = vld [vmem:[%s1368 + $0x20] sm:%s1358]
                %1379 = vst [vmem:[%s1369 + $0x20] sm:%s1358] %v1378
                %v1380 = vld [vmem:[%s1368 + $0x28] sm:%s1358]
                %1381 = vst [vmem:[%s1369 + $0x28] sm:%s1358] %v1380
                %v1382 = vld [vmem:[%s1368 + $0x30] sm:%s1358]
                %1383 = vst [vmem:[%s1369 + $0x30] sm:%s1358] %v1382
                %v1384 = vld [vmem:[%s1368 + $0x38] sm:%s1358]
                %1385 = vst [vmem:[%s1369 + $0x38] sm:%s1358] %v1384
                %v1386 = vld [vmem:[%s1368 + $0x40] sm:%s1358]
                %1387 = vst [vmem:[%s1369 + $0x40] sm:%s1358] %v1386
                %v1388 = vld [vmem:[%s1368 + $0x48] sm:%s1358]
                %1389 = vst [vmem:[%s1369 + $0x48] sm:%s1358] %v1388
                %v1390 = vld [vmem:[%s1368 + $0x50] sm:%s1358]
                %1391 = vst [vmem:[%s1369 + $0x50] sm:%s1358] %v1390
                %v1392 = vld [vmem:[%s1368 + $0x58] sm:%s1358]
                %1393 = vst [vmem:[%s1369 + $0x58] sm:%s1358] %v1392
                %v1394 = vld [vmem:[%s1368 + $0x60] sm:%s1358]
                %1395 = vst [vmem:[%s1369 + $0x60] sm:%s1358] %v1394
                %s1396 = sadd.s32 1, %s1367
                %p1397 = scmp.ge.s32.totalorder %s1396, %s1359
                %s1398 = scalar_select %p1397, 0, %s1396
                %s1399 = smul.u32 %s1398, 104
                %s1400 = smul.u32 %s1398, 104
                %s1401 = scalar_lea.vmem %s1338, %s1399 [#allocation2]
                %s1402 = scalar_lea.vmem %s1349, %s1400
              $region65: #{ck_forward.1} parent=59 // loop_footer
                %s1364 = sadd.s32 %s1362, 1
              $region66: #{ck_forward.1} parent=59 // loop_footer_branch
                %1361 = sbr.rel target = $region62
              $region67: #{ck_forward.1} parent=59 // loop_exit
                _
              %s1403 = sdiv.u32.pop %s1345, 13
              %s1404 = srem.u32.pop %s1345, 13
              %s1405 = smul.u32 %s1403, 13
              %s1406 = smul.u32 8, %s1405
              %s1407 = scalar_lea.vmem %s1338, %s1406 [#allocation2]
              %s1408 = smul.u32 8, %s1405
              %s1409 = scalar_lea.vmem %s1349, %s1408
              // While loop
              $region68: #{ck_forward.1} parent=59 // loop_pre_header
                _
              $region69: #{ck_forward.1} parent=59 // loop_header
                %s1411 = sphi 0, %s1413
                %p1412 = scmp.ge.s32.totalorder %s1411, %s1404
                %s1416 = sphi 0, %s1423
                %s1417 = sphi %s1407, %s1426
                %s1418 = sphi %s1409, %s1427
              $region70: #{ck_forward.1} parent=59 // loop_header_branch
                %1415 = sbr.rel (%p1412) target = $region74
              $region71: #{ck_forward.1} parent=59 // loop_body
                %v1419 = vld [vmem:[%s1417] sm:%s1358]
                %1420 = vst [vmem:[%s1418] sm:%s1358] %v1419
                %s1421 = sadd.s32 1, %s1416
                %p1422 = scmp.ge.s32.totalorder %s1421, %s1404
                %s1423 = scalar_select %p1422, 0, %s1421
                %s1424 = smul.u32 %s1423, 8
                %s1425 = smul.u32 %s1423, 8
                %s1426 = scalar_lea.vmem %s1407, %s1424 [#allocation2]
                %s1427 = scalar_lea.vmem %s1409, %s1425
              $region72: #{ck_forward.1} parent=59 // loop_footer
                %s1413 = sadd.s32 %s1411, 1
              $region73: #{ck_forward.1} parent=59 // loop_footer_branch
                %1410 = sbr.rel target = $region69
              $region74: #{ck_forward.1} parent=59 // loop_exit
                _
            $region60: #{ck_forward.1} parent=51 // pred_fallthru
              _
          $region52: #{ck_forward.1} parent=47 // pred_fallthru
            _
          %1501 = vnop
        $region48: #{ck_forward.1} parent=43 // pred_fallthru
          _
      $region44: #{ck_forward.1} parent=5 // pred_fallthru
        _
      %p1502 = scmp.le.s32.totalorder 2, %s12
      // Predicated region
      $region97: #{ck_forward.1} parent=5 // pred_check
        %p1503 = pneg %p1502
      $region98: #{ck_forward.1} parent=5 // pred_check_branch
        %1505 = sbr.rel (%p1503) target = $region100
      $region99: #{ck_forward.1} parent=5 // pred_region
        %s1506 = ssub.s32 %s12, 2
        // Predicated region
        $region101: #{ck_forward.1} parent=99 // pred_check
          %p1507 = pneg %p177
        $region102: #{ck_forward.1} parent=99 // pred_check_branch
          %1509 = sbr.rel (%p1507) target = $region104
        $region103: #{ck_forward.1} parent=99 // pred_region
          %s1510 = sand.u32 %s162, 1
          %s1511 = sand.u32 %s162, 1
          %s1512 = smul.addr %s1511, 104
          %s1513 = scalar_lea.vmem [#allocation2], %s1512
        $region104: #{ck_forward.1} parent=99 // pred_fallthru
          _
      $region100: #{ck_forward.1} parent=5 // pred_fallthru
        _
    $region6: #{ck_forward.1} parent=1 // loop_footer
      %s16 = sadd.s32 1, %s12
    $region7: #{ck_forward.1} parent=1 // loop_footer_branch
      %11 = sbr.rel target = $region3
    $region8: #{ck_forward.1} parent=1 // loop_exit
      _

</llo_original>
